<compile_context>
chip_gen: v5e
topology: v5e:2x2
jax: 0.10.0
libtpu: 0.0.40
codegen_flags: <defaults>
</compile_context>

<pallas_src>
import functools

import jax
import jax.numpy as jnp
from jax.experimental import pallas as pl
from jax.experimental.pallas import tpu as pltpu


def _layernorm(v, g, b, eps):
    mu = jnp.mean(v, axis=-1, keepdims=True)
    var = jnp.mean((v - mu) ** 2, axis=-1, keepdims=True)
    return (v - mu) * jax.lax.rsqrt(var + eps) * g + b


def _gelu_exact(x):
    # PyTorch nn.GELU default = exact erf formulation.
    return 0.5 * x * (1.0 + jax.lax.erf(x * 0.7071067811865476))


def transformer_layer_kernel(
    x_ref,                       # (1, S, H)  one batch element
    ln_ref,                      # (4, H)     [ln1_g, ln1_b, ln2_g, ln2_b]  f32
    wqkv_ref, bqkv_ref,          # (H, 3H) bf16, (1, 3H) f32
    wo_ref, bo_ref,              # (H, H)  bf16, (1, H)  f32
    w1_ref, b1_ref,              # (H, F)  bf16, (1, F)  f32
    w2_ref, b2_ref,              # (F, H)  bf16, (1, H)  f32
    o_ref,                       # (1, S, H)
    *, num_heads, eps,
):
    x = x_ref[0].astype(jnp.float32)                      # (S, H)
    S, H = x.shape
    dh = H // num_heads
    scale = dh ** -0.5

    # ---- self-attention (pre-LayerNorm) --------------------------------------
    ln1 = _layernorm(x, ln_ref[0:1, :], ln_ref[1:2, :], eps)

    # fused QKV projection: one bf16 MXU pass, f32 accumulation.
    qkv = jnp.dot(ln1.astype(jnp.bfloat16), wqkv_ref[...],
                  preferred_element_type=jnp.float32) + bqkv_ref[...]    # (S, 3H)

    q = qkv[:, 0 * H:1 * H].reshape(S, num_heads, dh)
    k = qkv[:, 1 * H:2 * H].reshape(S, num_heads, dh)
    v = qkv[:, 2 * H:3 * H].reshape(S, num_heads, dh)

    # head-major batched attention: (num_heads, S, dh)
    qh = pltpu.einshape("shd->hsd", q).astype(jnp.bfloat16)
    kh = pltpu.einshape("shd->hsd", k).astype(jnp.bfloat16)
    vh = pltpu.einshape("shd->hsd", v).astype(jnp.bfloat16)

    s = jnp.einsum("hqd,hkd->hqk", qh, kh,
                   preferred_element_type=jnp.float32) * scale           # (nh, S, S)
    s = s - jnp.max(s, axis=-1, keepdims=True)
    e = jnp.exp(s)
    p = e * pl.reciprocal(jnp.sum(e, axis=-1, keepdims=True), approx=True)

    ctx = jnp.einsum("hqk,hkd->hqd", p.astype(jnp.bfloat16), vh,
                     preferred_element_type=jnp.float32)                 # (nh, S, dh)
    ctx = pltpu.einshape("hsd->shd", ctx).reshape(S, H)

    attn_out = jnp.dot(ctx.astype(jnp.bfloat16), wo_ref[...],
                       preferred_element_type=jnp.float32) + bo_ref[...]
    x1 = x + attn_out                                                     # residual 1

    # ---- LayerNorm-MLP -------------------------------------------------------
    ln2 = _layernorm(x1, ln_ref[2:3, :], ln_ref[3:4, :], eps)
    hmid = jnp.dot(ln2.astype(jnp.bfloat16), w1_ref[...],
                   preferred_element_type=jnp.float32) + b1_ref[...]
    hmid = _gelu_exact(hmid)
    mlp_out = jnp.dot(hmid.astype(jnp.bfloat16), w2_ref[...],
                      preferred_element_type=jnp.float32) + b2_ref[...]

    o_ref[0] = (x1 + mlp_out).astype(o_ref.dtype)                         # residual 2


def _pack_params(params):
    """Host-side one-time packing: fuse QKV, pre-transpose weights, cast to bf16."""
    w_qkv = jnp.concatenate([params["wq"], params["wk"], params["wv"]], axis=0)
    b_qkv = jnp.concatenate([params["bq"], params["bk"], params["bv"]], axis=1)
    ln_p = jnp.concatenate([params["ln1_g"], params["ln1_b"],
                            params["ln2_g"], params["ln2_b"]], axis=0)
    return [
        ln_p.astype(jnp.float32),                       # (4, H)
        w_qkv.T.astype(jnp.bfloat16),                   # (H, 3H)
        b_qkv.astype(jnp.float32),                      # (1, 3H)
        params["wo"].T.astype(jnp.bfloat16),            # (H, H)
        params["bo"].astype(jnp.float32),               # (1, H)
        params["w1"].T.astype(jnp.bfloat16),            # (H, F)
        params["b1"].astype(jnp.float32),               # (1, F)
        params["w2"].T.astype(jnp.bfloat16),            # (F, H)
        params["b2"].astype(jnp.float32),               # (1, H)
    ]


def transformer_layer(x_sbh, params, *, num_heads, eps=1e-5):
    """x_sbh: (S, B, H) in the module's default 'sbhd' convention."""
    S, B, H = x_sbh.shape
    # sbhd -> bshd once so per-batch blocks are (1, S, H); blocking the batch
    # (sublane) dim of an (S, B, H) array to 1 would violate the (8, 128)
    # last-two-dims blocking rule when B < 8.
    x = jnp.transpose(x_sbh, (1, 0, 2))                 # (B, S, H)

    flat = _pack_params(params)

    def resident(a):   # full-array block, constant index map -> stays in VMEM
        return pl.BlockSpec(a.shape, lambda b: (0, 0))

    out = pl.pallas_call(
        functools.partial(transformer_layer_kernel, num_heads=num_heads, eps=eps),
        out_shape=jax.ShapeDtypeStruct((B, S, H), x_sbh.dtype),
        grid=(B,),
        in_specs=[pl.BlockSpec((1, S, H), lambda b: (b, 0, 0))]
                 + [resident(a) for a in flat],
        out_specs=pl.BlockSpec((1, S, H), lambda b: (b, 0, 0)),
        compiler_params=pltpu.CompilerParams(
            dimension_semantics=("parallel",)),          # batch elems independent
    )(x, *flat)

    # TODO(synk): for long sequences / large FFN, additionally tile S
    # (flash-style online softmax) and the FFN contraction with an accumulator
    # scratch instead of holding the full (S,H)/(S,F) working set per grid step.
    return jnp.transpose(out, (1, 0, 2))


def init_params(key, hidden, ffn_hidden):
    ks = jax.random.split(key, 8)
    scale = 0.02
    p = {
        "ln1_g": jnp.ones((1, hidden), jnp.float32),
        "ln1_b": jnp.zeros((1, hidden), jnp.float32),
        "wq": scale * jax.random.normal(ks[0], (hidden, hidden), jnp.float32),
        "bq": jnp.zeros((1, hidden), jnp.float32),
        "wk": scale * jax.random.normal(ks[1], (hidden, hidden), jnp.float32),
        "bk": jnp.zeros((1, hidden), jnp.float32),
        "wv": scale * jax.random.normal(ks[2], (hidden, hidden), jnp.float32),
        "bv": jnp.zeros((1, hidden), jnp.float32),
        "wo": scale * jax.random.normal(ks[3], (hidden, hidden), jnp.float32),
        "bo": scale * jax.random.normal(ks[4], (1, hidden), jnp.float32),
        "ln2_g": jnp.ones((1, hidden), jnp.float32),
        "ln2_b": jnp.zeros((1, hidden), jnp.float32),
        "w1": scale * jax.random.normal(ks[5], (ffn_hidden, hidden), jnp.float32),
        "b1": scale * jax.random.normal(ks[6], (1, ffn_hidden), jnp.float32),
        "w2": scale * jax.random.normal(ks[7], (hidden, ffn_hidden), jnp.float32),
        "b2": jnp.zeros((1, hidden), jnp.float32),
    }
    return p


def reference(x_sbh, params, num_heads, eps=1e-5):
    """Pure-JAX f32 reference of the same forward pass (for verification)."""
    x = jnp.transpose(x_sbh, (1, 0, 2)).astype(jnp.float32)  # (B, S, H)
    B, S, H = x.shape
    dh = H // num_heads

    def ln(v, g, b):
        mu = v.mean(-1, keepdims=True)
        var = ((v - mu) ** 2).mean(-1, keepdims=True)
        return (v - mu) / jnp.sqrt(var + eps) * g + b

    l1 = ln(x, params["ln1_g"], params["ln1_b"])
    q = l1 @ params["wq"].T + params["bq"]
    k = l1 @ params["wk"].T + params["bk"]
    v = l1 @ params["wv"].T + params["bv"]
    q = q.reshape(B, S, num_heads, dh)
    k = k.reshape(B, S, num_heads, dh)
    v = v.reshape(B, S, num_heads, dh)
    s = jnp.einsum("bqhd,bkhd->bhqk", q, k) / jnp.sqrt(jnp.float32(dh))
    p = jax.nn.softmax(s, axis=-1)
    ctx = jnp.einsum("bhqk,bkhd->bqhd", p, v).reshape(B, S, H)
    attn = ctx @ params["wo"].T + params["bo"]
    x1 = x + attn
    l2 = ln(x1, params["ln2_g"], params["ln2_b"])
    h = jax.nn.gelu(l2 @ params["w1"].T + params["b1"], approximate=False)
    y = x1 + (h @ params["w2"].T + params["b2"])
    return jnp.transpose(y, (1, 0, 2))


if __name__ == "__main__":
    # small shapes: seq=8, batch=2, hidden=32, ffn=64, heads=4
    S, B, H = 8, 2, 32
    FFN, NH = 64, 4

    key = jax.random.PRNGKey(0)
    kx, kp = jax.random.split(key)
    x = jax.random.normal(kx, (S, B, H), jnp.float32)   # sbhd layout
    params = init_params(kp, H, FFN)

    out = transformer_layer(x, params, num_heads=NH)
    out = jax.block_until_ready(out)

    ref = reference(x, params, NH)
    assert out.shape == (S, B, H) and out.dtype == x.dtype
    # bf16 matmul inputs with f32 accumulation + approx reciprocal -> loosen tol.
    assert jnp.allclose(out, ref, atol=2e-2, rtol=2e-2), float(jnp.max(jnp.abs(out - ref)))

    # TODO(synk): dropout / drop_path / decoder cross-attention are training-mode
    # or decoder-only paths and are identity / absent in this encoder eval forward.
    print("KERNEL_OK")
</pallas_src>

<mosaic_0001>
module attributes {stable_mosaic.version = 11 : i64} {
  func.func @transformer_layer_kernel(%arg0: i32, %arg1: memref<1x8x32xf32, #tpu.memory_space<vmem>>, %arg2: memref<4x32xf32, #tpu.memory_space<vmem>>, %arg3: memref<32x96xbf16, #tpu.memory_space<vmem>>, %arg4: memref<1x96xf32, #tpu.memory_space<vmem>>, %arg5: memref<32x32xbf16, #tpu.memory_space<vmem>>, %arg6: memref<1x32xf32, #tpu.memory_space<vmem>>, %arg7: memref<32x64xbf16, #tpu.memory_space<vmem>>, %arg8: memref<1x64xf32, #tpu.memory_space<vmem>>, %arg9: memref<64x32xbf16, #tpu.memory_space<vmem>>, %arg10: memref<1x32xf32, #tpu.memory_space<vmem>>, %arg11: memref<1x8x32xf32, #tpu.memory_space<vmem>>) attributes {dimension_semantics = [#tpu.dimension_semantics<parallel>], iteration_bounds = array<i64: 2>, scalar_prefetch = 0 : i64, scratch_operands = 0 : i64, tpu.core_type = #tpu.core_type<tc>, window_params = [{transform_indices = @transform_0, window_bounds = array<i64: 1, 8, 32>}, {pipeline_mode = #tpu.pipeline_mode<synchronous>, transform_indices = @transform_1, window_bounds = array<i64: 4, 32>}, {pipeline_mode = #tpu.pipeline_mode<synchronous>, transform_indices = @transform_2, window_bounds = array<i64: 32, 96>}, {pipeline_mode = #tpu.pipeline_mode<synchronous>, transform_indices = @transform_3, window_bounds = array<i64: 1, 96>}, {pipeline_mode = #tpu.pipeline_mode<synchronous>, transform_indices = @transform_4, window_bounds = array<i64: 32, 32>}, {pipeline_mode = #tpu.pipeline_mode<synchronous>, transform_indices = @transform_5, window_bounds = array<i64: 1, 32>}, {pipeline_mode = #tpu.pipeline_mode<synchronous>, transform_indices = @transform_6, window_bounds = array<i64: 32, 64>}, {pipeline_mode = #tpu.pipeline_mode<synchronous>, transform_indices = @transform_7, window_bounds = array<i64: 1, 64>}, {pipeline_mode = #tpu.pipeline_mode<synchronous>, transform_indices = @transform_8, window_bounds = array<i64: 64, 32>}, {pipeline_mode = #tpu.pipeline_mode<synchronous>, transform_indices = @transform_9, window_bounds = array<i64: 1, 32>}, {transform_indices = @transform_10, window_bounds = array<i64: 1, 8, 32>}]} {
    %c0 = arith.constant 0 : index
    %c0_0 = arith.constant 0 : index
    %c0_1 = arith.constant 0 : index
    %0 = vector.load %arg1[%c0, %c0_0, %c0_1] : memref<1x8x32xf32, #tpu.memory_space<vmem>>, vector<1x8x32xf32>
    %1 = vector.shape_cast %0 : vector<1x8x32xf32> to vector<8x32xf32>
    %c0_2 = arith.constant 0 : index
    %c0_3 = arith.constant 0 : index
    %2 = vector.load %arg2[%c0_2, %c0_3] : memref<4x32xf32, #tpu.memory_space<vmem>>, vector<1x32xf32>
    %c1 = arith.constant 1 : index
    %c0_4 = arith.constant 0 : index
    %3 = vector.load %arg2[%c1, %c0_4] : memref<4x32xf32, #tpu.memory_space<vmem>>, vector<1x32xf32>
    %cst = arith.constant dense<0.000000e+00> : vector<8xf32>
    %4 = vector.multi_reduction <add>, %1, %cst [1] : vector<8x32xf32> to vector<8xf32>
    %5 = vector.shape_cast %4 : vector<8xf32> to vector<8x1xf32>
    %cst_5 = arith.constant 3.200000e+01 : f32
    %6 = vector.broadcast %cst_5 : f32 to vector<8x1xf32>
    %7 = arith.divf %5, %6 : vector<8x1xf32>
    %8 = vector.broadcast %7 : vector<8x1xf32> to vector<8x32xf32>
    %9 = arith.subf %1, %8 : vector<8x32xf32>
    %10 = arith.mulf %9, %9 : vector<8x32xf32>
    %cst_6 = arith.constant dense<0.000000e+00> : vector<8xf32>
    %11 = vector.multi_reduction <add>, %10, %cst_6 [1] : vector<8x32xf32> to vector<8xf32>
    %12 = vector.shape_cast %11 : vector<8xf32> to vector<8x1xf32>
    %cst_7 = arith.constant 3.200000e+01 : f32
    %13 = vector.broadcast %cst_7 : f32 to vector<8x1xf32>
    %14 = arith.divf %12, %13 : vector<8x1xf32>
    %15 = vector.broadcast %7 : vector<8x1xf32> to vector<8x32xf32>
    %16 = arith.subf %1, %15 : vector<8x32xf32>
    %cst_8 = arith.constant 9.99999974E-6 : f32
    %17 = vector.broadcast %cst_8 : f32 to vector<8x1xf32>
    %18 = arith.addf %14, %17 : vector<8x1xf32>
    %19 = math.rsqrt %18 : vector<8x1xf32>
    %20 = vector.broadcast %19 : vector<8x1xf32> to vector<8x32xf32>
    %21 = arith.mulf %16, %20 : vector<8x32xf32>
    %22 = vector.broadcast %2 : vector<1x32xf32> to vector<8x32xf32>
    %23 = arith.mulf %21, %22 : vector<8x32xf32>
    %24 = vector.broadcast %3 : vector<1x32xf32> to vector<8x32xf32>
    %25 = arith.addf %23, %24 : vector<8x32xf32>
    %26 = arith.truncf %25 : vector<8x32xf32> to vector<8x32xbf16>
    %c0_9 = arith.constant 0 : index
    %c0_10 = arith.constant 0 : index
    %27 = vector.load %arg3[%c0_9, %c0_10] : memref<32x96xbf16, #tpu.memory_space<vmem>>, vector<32x96xbf16>
    %cst_11 = arith.constant dense<0.000000e+00> : vector<8x96xf32>
    %28 = tpu.matmul %26, %27, %cst_11 {dimension_numbers = #tpu.dot_dimension_numbers<[1], [0], [0], [1], [0, 0, 1, 1], [], []>} : vector<8x32xbf16>, vector<32x96xbf16>, vector<8x96xf32> -> vector<8x96xf32>
    %c0_12 = arith.constant 0 : index
    %c0_13 = arith.constant 0 : index
    %29 = vector.load %arg4[%c0_12, %c0_13] : memref<1x96xf32, #tpu.memory_space<vmem>>, vector<1x96xf32>
    %30 = vector.broadcast %29 : vector<1x96xf32> to vector<8x96xf32>
    %31 = arith.addf %28, %30 : vector<8x96xf32>
    %32 = vector.extract_strided_slice %31 {offsets = [0, 0], sizes = [8, 32], strides = [1, 1]} : vector<8x96xf32> to vector<8x32xf32>
    %33 = vector.shape_cast %32 : vector<8x32xf32> to vector<8x4x8xf32>
    %34 = vector.extract_strided_slice %31 {offsets = [0, 32], sizes = [8, 32], strides = [1, 1]} : vector<8x96xf32> to vector<8x32xf32>
    %35 = vector.shape_cast %34 : vector<8x32xf32> to vector<8x4x8xf32>
    %36 = vector.extract_strided_slice %31 {offsets = [0, 64], sizes = [8, 32], strides = [1, 1]} : vector<8x96xf32> to vector<8x32xf32>
    %37 = vector.shape_cast %36 : vector<8x32xf32> to vector<8x4x8xf32>
    %38 = tpu.transpose %33, [1, 0, 2] : vector<8x4x8xf32> -> vector<4x8x8xf32>
    %39 = arith.truncf %38 : vector<4x8x8xf32> to vector<4x8x8xbf16>
    %40 = tpu.transpose %35, [1, 0, 2] : vector<8x4x8xf32> -> vector<4x8x8xf32>
    %41 = arith.truncf %40 : vector<4x8x8xf32> to vector<4x8x8xbf16>
    %42 = tpu.transpose %37, [1, 0, 2] : vector<8x4x8xf32> -> vector<4x8x8xf32>
    %43 = arith.truncf %42 : vector<4x8x8xf32> to vector<4x8x8xbf16>
    "tpu.trace_start"() <{level = 10 : i32, message = "hqd,hkd->hqk"}> : () -> ()
    %cst_14 = arith.constant dense<0.000000e+00> : vector<4x8x8xf32>
    %44 = tpu.matmul %39, %41, %cst_14 {dimension_numbers = #tpu.dot_dimension_numbers<[2], [2], [1], [1], [0, 0, 0, 1, 1, 1], [0], [0]>} : vector<4x8x8xbf16>, vector<4x8x8xbf16>, vector<4x8x8xf32> -> vector<4x8x8xf32>
    "tpu.trace_stop"() : () -> ()
    %cst_15 = arith.constant 0.353553385 : f32
    %45 = vector.broadcast %cst_15 : f32 to vector<4x8x8xf32>
    %46 = arith.mulf %44, %45 : vector<4x8x8xf32>
    %cst_16 = arith.constant dense<0xFF800000> : vector<4x8xf32>
    %47 = vector.multi_reduction <maximumf>, %46, %cst_16 [2] : vector<4x8x8xf32> to vector<4x8xf32>
    %48 = vector.shape_cast %47 : vector<4x8xf32> to vector<4x8x1xf32>
    %49 = vector.broadcast %48 : vector<4x8x1xf32> to vector<4x8x8xf32>
    %50 = arith.subf %46, %49 : vector<4x8x8xf32>
    %51 = math.exp %50 : vector<4x8x8xf32>
    %cst_17 = arith.constant dense<0.000000e+00> : vector<4x8xf32>
    %52 = vector.multi_reduction <add>, %51, %cst_17 [2] : vector<4x8x8xf32> to vector<4x8xf32>
    %53 = vector.shape_cast %52 : vector<4x8xf32> to vector<4x8x1xf32>
    %54 = tpu.reciprocal %53 {approx = true} : vector<4x8x1xf32> -> vector<4x8x1xf32>
    %55 = vector.broadcast %54 : vector<4x8x1xf32> to vector<4x8x8xf32>
    %56 = arith.mulf %51, %55 : vector<4x8x8xf32>
    %57 = arith.truncf %56 : vector<4x8x8xf32> to vector<4x8x8xbf16>
    "tpu.trace_start"() <{level = 10 : i32, message = "hqk,hkd->hqd"}> : () -> ()
    %cst_18 = arith.constant dense<0.000000e+00> : vector<4x8x8xf32>
    %58 = tpu.matmul %57, %43, %cst_18 {dimension_numbers = #tpu.dot_dimension_numbers<[2], [1], [1], [2], [0, 0, 0, 1, 1, 2], [0], [0]>} : vector<4x8x8xbf16>, vector<4x8x8xbf16>, vector<4x8x8xf32> -> vector<4x8x8xf32>
    "tpu.trace_stop"() : () -> ()
    %59 = tpu.transpose %58, [1, 0, 2] : vector<4x8x8xf32> -> vector<8x4x8xf32>
    %60 = vector.shape_cast %59 : vector<8x4x8xf32> to vector<8x32xf32>
    %61 = arith.truncf %60 : vector<8x32xf32> to vector<8x32xbf16>
    %c0_19 = arith.constant 0 : index
    %c0_20 = arith.constant 0 : index
    %62 = vector.load %arg5[%c0_19, %c0_20] : memref<32x32xbf16, #tpu.memory_space<vmem>>, vector<32x32xbf16>
    %cst_21 = arith.constant dense<0.000000e+00> : vector<8x32xf32>
    %63 = tpu.matmul %61, %62, %cst_21 {dimension_numbers = #tpu.dot_dimension_numbers<[1], [0], [0], [1], [0, 0, 1, 1], [], []>} : vector<8x32xbf16>, vector<32x32xbf16>, vector<8x32xf32> -> vector<8x32xf32>
    %c0_22 = arith.constant 0 : index
    %c0_23 = arith.constant 0 : index
    %64 = vector.load %arg6[%c0_22, %c0_23] : memref<1x32xf32, #tpu.memory_space<vmem>>, vector<1x32xf32>
    %65 = vector.broadcast %64 : vector<1x32xf32> to vector<8x32xf32>
    %66 = arith.addf %63, %65 : vector<8x32xf32>
    %67 = arith.addf %1, %66 : vector<8x32xf32>
    %c2 = arith.constant 2 : index
    %c0_24 = arith.constant 0 : index
    %68 = vector.load %arg2[%c2, %c0_24] : memref<4x32xf32, #tpu.memory_space<vmem>>, vector<1x32xf32>
    %c3 = arith.constant 3 : index
    %c0_25 = arith.constant 0 : index
    %69 = vector.load %arg2[%c3, %c0_25] : memref<4x32xf32, #tpu.memory_space<vmem>>, vector<1x32xf32>
    %cst_26 = arith.constant dense<0.000000e+00> : vector<8xf32>
    %70 = vector.multi_reduction <add>, %67, %cst_26 [1] : vector<8x32xf32> to vector<8xf32>
    %71 = vector.shape_cast %70 : vector<8xf32> to vector<8x1xf32>
    %cst_27 = arith.constant 3.200000e+01 : f32
    %72 = vector.broadcast %cst_27 : f32 to vector<8x1xf32>
    %73 = arith.divf %71, %72 : vector<8x1xf32>
    %74 = vector.broadcast %73 : vector<8x1xf32> to vector<8x32xf32>
    %75 = arith.subf %67, %74 : vector<8x32xf32>
    %76 = arith.mulf %75, %75 : vector<8x32xf32>
    %cst_28 = arith.constant dense<0.000000e+00> : vector<8xf32>
    %77 = vector.multi_reduction <add>, %76, %cst_28 [1] : vector<8x32xf32> to vector<8xf32>
    %78 = vector.shape_cast %77 : vector<8xf32> to vector<8x1xf32>
    %cst_29 = arith.constant 3.200000e+01 : f32
    %79 = vector.broadcast %cst_29 : f32 to vector<8x1xf32>
    %80 = arith.divf %78, %79 : vector<8x1xf32>
    %81 = vector.broadcast %73 : vector<8x1xf32> to vector<8x32xf32>
    %82 = arith.subf %67, %81 : vector<8x32xf32>
    %cst_30 = arith.constant 9.99999974E-6 : f32
    %83 = vector.broadcast %cst_30 : f32 to vector<8x1xf32>
    %84 = arith.addf %80, %83 : vector<8x1xf32>
    %85 = math.rsqrt %84 : vector<8x1xf32>
    %86 = vector.broadcast %85 : vector<8x1xf32> to vector<8x32xf32>
    %87 = arith.mulf %82, %86 : vector<8x32xf32>
    %88 = vector.broadcast %68 : vector<1x32xf32> to vector<8x32xf32>
    %89 = arith.mulf %87, %88 : vector<8x32xf32>
    %90 = vector.broadcast %69 : vector<1x32xf32> to vector<8x32xf32>
    %91 = arith.addf %89, %90 : vector<8x32xf32>
    %92 = arith.truncf %91 : vector<8x32xf32> to vector<8x32xbf16>
    %c0_31 = arith.constant 0 : index
    %c0_32 = arith.constant 0 : index
    %93 = vector.load %arg7[%c0_31, %c0_32] : memref<32x64xbf16, #tpu.memory_space<vmem>>, vector<32x64xbf16>
    %cst_33 = arith.constant dense<0.000000e+00> : vector<8x64xf32>
    %94 = tpu.matmul %92, %93, %cst_33 {dimension_numbers = #tpu.dot_dimension_numbers<[1], [0], [0], [1], [0, 0, 1, 1], [], []>} : vector<8x32xbf16>, vector<32x64xbf16>, vector<8x64xf32> -> vector<8x64xf32>
    %c0_34 = arith.constant 0 : index
    %c0_35 = arith.constant 0 : index
    %95 = vector.load %arg8[%c0_34, %c0_35] : memref<1x64xf32, #tpu.memory_space<vmem>>, vector<1x64xf32>
    %96 = vector.broadcast %95 : vector<1x64xf32> to vector<8x64xf32>
    %97 = arith.addf %94, %96 : vector<8x64xf32>
    %cst_36 = arith.constant 5.000000e-01 : f32
    %98 = vector.broadcast %cst_36 : f32 to vector<8x64xf32>
    %99 = arith.mulf %98, %97 : vector<8x64xf32>
    %cst_37 = arith.constant 0.707106769 : f32
    %100 = vector.broadcast %cst_37 : f32 to vector<8x64xf32>
    %101 = arith.mulf %97, %100 : vector<8x64xf32>
    %102 = math.erf %101 : vector<8x64xf32>
    %cst_38 = arith.constant 1.000000e+00 : f32
    %103 = vector.broadcast %cst_38 : f32 to vector<8x64xf32>
    %104 = arith.addf %103, %102 : vector<8x64xf32>
    %105 = arith.mulf %99, %104 : vector<8x64xf32>
    %106 = arith.truncf %105 : vector<8x64xf32> to vector<8x64xbf16>
    %c0_39 = arith.constant 0 : index
    %c0_40 = arith.constant 0 : index
    %107 = vector.load %arg9[%c0_39, %c0_40] : memref<64x32xbf16, #tpu.memory_space<vmem>>, vector<64x32xbf16>
    %cst_41 = arith.constant dense<0.000000e+00> : vector<8x32xf32>
    %108 = tpu.matmul %106, %107, %cst_41 {dimension_numbers = #tpu.dot_dimension_numbers<[1], [0], [0], [1], [0, 0, 1, 1], [], []>} : vector<8x64xbf16>, vector<64x32xbf16>, vector<8x32xf32> -> vector<8x32xf32>
    %c0_42 = arith.constant 0 : index
    %c0_43 = arith.constant 0 : index
    %109 = vector.load %arg10[%c0_42, %c0_43] : memref<1x32xf32, #tpu.memory_space<vmem>>, vector<1x32xf32>
    %110 = vector.broadcast %109 : vector<1x32xf32> to vector<8x32xf32>
    %111 = arith.addf %108, %110 : vector<8x32xf32>
    %112 = arith.addf %67, %111 : vector<8x32xf32>
    %c0_44 = arith.constant 0 : index
    %c0_45 = arith.constant 0 : index
    %c0_46 = arith.constant 0 : index
    %113 = vector.load %arg11[%c0_44, %c0_45, %c0_46] : memref<1x8x32xf32, #tpu.memory_space<vmem>>, vector<1x8x32xf32>
    %114 = vector.shape_cast %113 : vector<1x8x32xf32> to vector<8x32xf32>
    %115 = vector.shape_cast %112 : vector<8x32xf32> to vector<1x8x32xf32>
    tpu.vector_store %arg11[%c0_44, %c0_45, %c0_46], %115 {strides = array<i32>} : memref<1x8x32xf32, #tpu.memory_space<vmem>>, vector<1x8x32xf32>,
    return
  }
  func.func @transform_0(%arg0: i32) -> (i32, i32, i32) {
    %c0_i32 = arith.constant 0 : i32
    %c0_i32_0 = arith.constant 0 : i32
    %c0_i32_1 = arith.constant 0 : i32
    return %arg0, %c0_i32, %c0_i32_0 : i32, i32, i32
  }
  func.func @transform_1(%arg0: i32) -> (i32, i32) {
    %c0_i32 = arith.constant 0 : i32
    %c0_i32_0 = arith.constant 0 : i32
    %c0_i32_1 = arith.constant 0 : i32
    return %c0_i32, %c0_i32_0 : i32, i32
  }
  func.func @transform_2(%arg0: i32) -> (i32, i32) {
    %c0_i32 = arith.constant 0 : i32
    %c0_i32_0 = arith.constant 0 : i32
    %c0_i32_1 = arith.constant 0 : i32
    return %c0_i32, %c0_i32_0 : i32, i32
  }
  func.func @transform_3(%arg0: i32) -> (i32, i32) {
    %c0_i32 = arith.constant 0 : i32
    %c0_i32_0 = arith.constant 0 : i32
    %c0_i32_1 = arith.constant 0 : i32
    return %c0_i32, %c0_i32_0 : i32, i32
  }
  func.func @transform_4(%arg0: i32) -> (i32, i32) {
    %c0_i32 = arith.constant 0 : i32
    %c0_i32_0 = arith.constant 0 : i32
    %c0_i32_1 = arith.constant 0 : i32
    return %c0_i32, %c0_i32_0 : i32, i32
  }
  func.func @transform_5(%arg0: i32) -> (i32, i32) {
    %c0_i32 = arith.constant 0 : i32
    %c0_i32_0 = arith.constant 0 : i32
    %c0_i32_1 = arith.constant 0 : i32
    return %c0_i32, %c0_i32_0 : i32, i32
  }
  func.func @transform_6(%arg0: i32) -> (i32, i32) {
    %c0_i32 = arith.constant 0 : i32
    %c0_i32_0 = arith.constant 0 : i32
    %c0_i32_1 = arith.constant 0 : i32
    return %c0_i32, %c0_i32_0 : i32, i32
  }
  func.func @transform_7(%arg0: i32) -> (i32, i32) {
    %c0_i32 = arith.constant 0 : i32
    %c0_i32_0 = arith.constant 0 : i32
    %c0_i32_1 = arith.constant 0 : i32
    return %c0_i32, %c0_i32_0 : i32, i32
  }
  func.func @transform_8(%arg0: i32) -> (i32, i32) {
    %c0_i32 = arith.constant 0 : i32
    %c0_i32_0 = arith.constant 0 : i32
    %c0_i32_1 = arith.constant 0 : i32
    return %c0_i32, %c0_i32_0 : i32, i32
  }
  func.func @transform_9(%arg0: i32) -> (i32, i32) {
    %c0_i32 = arith.constant 0 : i32
    %c0_i32_0 = arith.constant 0 : i32
    %c0_i32_1 = arith.constant 0 : i32
    return %c0_i32, %c0_i32_0 : i32, i32
  }
  func.func @transform_10(%arg0: i32) -> (i32, i32, i32) {
    %c0_i32 = arith.constant 0 : i32
    %c0_i32_0 = arith.constant 0 : i32
    %c0_i32_1 = arith.constant 0 : i32
    return %arg0, %c0_i32, %c0_i32_0 : i32, i32, i32
  }
}

</mosaic_0001>

<llo_original>
// kernel: tpu_custom_call.1
$region0: #{tpu_custom_call.1}
  #allocation0 [shape = 'u32[]', space=smem, size = 0x4, offset = 0x4, fixed_abs, tag = 'smem constant byte address 0x4 - core index']
  #allocation1 [shape = 'u32[72,128]{1,0:T(1,128)}', space=vmem, size = 0x9000, scoped, tag = 'internal scratch']
  %s0 = inlined_call_operand.vmem [shape: f32[2,8,32], index: 0, kind: input, shape index: {}]
  %s1 = inlined_call_operand.hbm [shape: f32[4,32], index: 1, kind: input, shape index: {}]
  %s2 = inlined_call_operand.vmem [shape: bf16[32,96], index: 2, kind: input, shape index: {}]
  %s3 = inlined_call_operand.vmem [shape: f32[1,96], index: 3, kind: input, shape index: {}]
  %s4 = inlined_call_operand.vmem [shape: bf16[32,32], index: 4, kind: input, shape index: {}]
  %s5 = inlined_call_operand.vmem [shape: f32[1,32], index: 5, kind: input, shape index: {}]
  %s6 = inlined_call_operand.hbm [shape: bf16[32,64], index: 6, kind: input, shape index: {}]
  %s7 = inlined_call_operand.vmem [shape: f32[1,64], index: 7, kind: input, shape index: {}]
  %s8 = inlined_call_operand.vmem [shape: bf16[64,32], index: 8, kind: input, shape index: {}]
  %s9 = inlined_call_operand.vmem [shape: f32[1,32], index: 9, kind: input, shape index: {}]
  %s10 = inlined_call_operand.hbm [shape: f32[2,8,32], index: 10, kind: output, shape index: {}]
  %s11 = sld [smem:[#allocation0]]
  $region81: #{tpu_custom_call.1} parent=0
    _
  %s13 = ssub.s32 1, %s11
  %s14 = scalar_select 0, %s13, %s11
  $region1: #{tpu_custom_call.1} parent=0
    #allocation2 [shape = 'u8[2048]{0}', space=vmem, size = 0x800, scoped, tag = 'input window, operand 1, single buffered']
    #allocation3 [shape = 's32[2]{0}', space=sflag, size = 0x8, scoped, tag = 'scoped memory for tpu_custom_call.1']
    #allocation4 [shape = 's32[2]{0}', space=sflag, size = 0x8, scoped, tag = 'scoped memory for tpu_custom_call.1']
    #allocation5 [shape = 'u8[8192]{0}', space=vmem, size = 0x2000, scoped, tag = 'input window, operand 6, single buffered']
    #allocation6 [shape = 's32[1]{0}', space=sflag, size = 0x4, scoped, tag = 'scoped memory for tpu_custom_call.1']
    #allocation7 [shape = 'u8[8192]{0}', space=vmem, size = 0x2000, scoped, tag = 'output window, operand 0']
    %15 = vsyncpa [#allocation3], 0
    %16 = vsyncpa [#allocation6], 0
    %17 = vsyncpa [#allocation4], 0
    %s18 = scalar_lea.sflag [#allocation4], 1
    %19 = vsyncpa %s18, 0
    loop: start=0, step=1, limit=4
    $region2: #{tpu_custom_call.1} parent=1 // loop_pre_header
      _
    $region3: #{tpu_custom_call.1} parent=1 // loop_header
      %s21 = sphi 0, %s25
      %p22 = scmp.ge.s32.totalorder %s21, 4
      %s31 = sphi 0, %s33
      %s34 = sphi 0, %s31
      %s35 = sphi 0, %s34
      %s51 = sphi 0, %s35
      %s55 = sphi 0, %s55
      %s57 = sphi 0, %s55
      %s58 = sphi 0, %s57
      %s72 = sphi 0, %s58
      %s76 = sphi 0, %s76
      %s78 = sphi 0, %s76
      %s79 = sphi 0, %s78
      %s93 = sphi 0, %s79
      %s97 = sphi 0, %s97
      %s99 = sphi 0, %s97
      %s100 = sphi 0, %s99
      %s114 = sphi 0, %s100
      %s118 = sphi 0, %s118
      %s120 = sphi 0, %s118
      %s121 = sphi 0, %s120
      %s135 = sphi 0, %s121
      %s139 = sphi 0, %s139
      %s141 = sphi 0, %s139
      %s142 = sphi 0, %s141
      %s156 = sphi 0, %s142
      %s160 = sphi 0, %s160
      %s162 = sphi 0, %s160
      %s163 = sphi 0, %s162
      %s177 = sphi 0, %s163
      %s181 = sphi 0, %s181
      %s183 = sphi 0, %s181
      %s184 = sphi 0, %s183
      %s198 = sphi 0, %s184
      %s202 = sphi 0, %s202
      %s204 = sphi 0, %s202
      %s205 = sphi 0, %s204
      %s219 = sphi 0, %s205
      %s223 = sphi 0, %s223
      %s225 = sphi 0, %s223
      %s226 = sphi 0, %s225
      %s240 = sphi 0, %s226
      %s246 = sphi 0, %s248
      %s249 = sphi 0, %s246
      %s250 = sphi 0, %s249
      %s266 = sphi 0, %s250
    $region4: #{tpu_custom_call.1} parent=1 // loop_header_branch
      %24 = sbr.rel (%p22) target = $region8
    $region5: #{tpu_custom_call.1} parent=1 // loop_body
      %s26 = ssub.s32 %s21, 1
      %s27 = ssub.s32 %s21, 2
      %s28 = sadd.s32 %s21, 1
      %s29 = ssub.s32 %s21, %s28
      %p30 = scmp.eq.s32.totalorder %s29, 0
      %s32 = sadd.s32 %s31, 1
      %s33 = scalar_select %p30, %s31, %s32
      %p36 = pneg %p30
      %p37 = scmp.eq.s32.totalorder %s21, 1
      %p38 = por %p36, %p37
      %p39 = scmp.ne.s32.totalorder %s31, %s34
      %p40 = scmp.eq.s32.totalorder %s21, 0
      %p41 = por %p39, %p40
      %p42 = scmp.ne.s32.totalorder %s31, %s34
      %p43 = scmp.eq.s32.totalorder %s26, 1
      %p44 = por %p42, %p43
      %p45 = scmp.ne.s32.totalorder %s34, %s35
      %p46 = scmp.eq.s32.totalorder %s26, 0
      %p47 = por %p45, %p46
      %p48 = scmp.ne.s32.totalorder %s34, %s35
      %p49 = scmp.eq.s32.totalorder %s27, 1
      %p50 = por %p48, %p49
      %p52 = scmp.ne.s32.totalorder %s35, %s51
      %p53 = scmp.eq.s32.totalorder %s27, 0
      %p54 = por %p52, %p53
      %s56 = sadd.s32 %s55, 1
      %p59 = scmp.eq.s32.totalorder %s21, 1
      %p60 = scmp.ne.s32.totalorder %s55, %s57
      %p61 = scmp.eq.s32.totalorder %s21, 0
      %p62 = por %p60, %p61
      %p63 = scmp.ne.s32.totalorder %s55, %s57
      %p64 = scmp.eq.s32.totalorder %s26, 1
      %p65 = por %p63, %p64
      %p66 = scmp.ne.s32.totalorder %s57, %s58
      %p67 = scmp.eq.s32.totalorder %s26, 0
      %p68 = por %p66, %p67
      %p69 = scmp.ne.s32.totalorder %s57, %s58
      %p70 = scmp.eq.s32.totalorder %s27, 1
      %p71 = por %p69, %p70
      %p73 = scmp.ne.s32.totalorder %s58, %s72
      %p74 = scmp.eq.s32.totalorder %s27, 0
      %p75 = por %p73, %p74
      %s77 = sadd.s32 %s76, 1
      %p80 = scmp.eq.s32.totalorder %s21, 1
      %p81 = scmp.ne.s32.totalorder %s76, %s78
      %p82 = scmp.eq.s32.totalorder %s21, 0
      %p83 = por %p81, %p82
      %p84 = scmp.ne.s32.totalorder %s76, %s78
      %p85 = scmp.eq.s32.totalorder %s26, 1
      %p86 = por %p84, %p85
      %p87 = scmp.ne.s32.totalorder %s78, %s79
      %p88 = scmp.eq.s32.totalorder %s26, 0
      %p89 = por %p87, %p88
      %p90 = scmp.ne.s32.totalorder %s78, %s79
      %p91 = scmp.eq.s32.totalorder %s27, 1
      %p92 = por %p90, %p91
      %p94 = scmp.ne.s32.totalorder %s79, %s93
      %p95 = scmp.eq.s32.totalorder %s27, 0
      %p96 = por %p94, %p95
      %s98 = sadd.s32 %s97, 1
      %p101 = scmp.eq.s32.totalorder %s21, 1
      %p102 = scmp.ne.s32.totalorder %s97, %s99
      %p103 = scmp.eq.s32.totalorder %s21, 0
      %p104 = por %p102, %p103
      %p105 = scmp.ne.s32.totalorder %s97, %s99
      %p106 = scmp.eq.s32.totalorder %s26, 1
      %p107 = por %p105, %p106
      %p108 = scmp.ne.s32.totalorder %s99, %s100
      %p109 = scmp.eq.s32.totalorder %s26, 0
      %p110 = por %p108, %p109
      %p111 = scmp.ne.s32.totalorder %s99, %s100
      %p112 = scmp.eq.s32.totalorder %s27, 1
      %p113 = por %p111, %p112
      %p115 = scmp.ne.s32.totalorder %s100, %s114
      %p116 = scmp.eq.s32.totalorder %s27, 0
      %p117 = por %p115, %p116
      %s119 = sadd.s32 %s118, 1
      %p122 = scmp.eq.s32.totalorder %s21, 1
      %p123 = scmp.ne.s32.totalorder %s118, %s120
      %p124 = scmp.eq.s32.totalorder %s21, 0
      %p125 = por %p123, %p124
      %p126 = scmp.ne.s32.totalorder %s118, %s120
      %p127 = scmp.eq.s32.totalorder %s26, 1
      %p128 = por %p126, %p127
      %p129 = scmp.ne.s32.totalorder %s120, %s121
      %p130 = scmp.eq.s32.totalorder %s26, 0
      %p131 = por %p129, %p130
      %p132 = scmp.ne.s32.totalorder %s120, %s121
      %p133 = scmp.eq.s32.totalorder %s27, 1
      %p134 = por %p132, %p133
      %p136 = scmp.ne.s32.totalorder %s121, %s135
      %p137 = scmp.eq.s32.totalorder %s27, 0
      %p138 = por %p136, %p137
      %s140 = sadd.s32 %s139, 1
      %p143 = scmp.eq.s32.totalorder %s21, 1
      %p144 = scmp.ne.s32.totalorder %s139, %s141
      %p145 = scmp.eq.s32.totalorder %s21, 0
      %p146 = por %p144, %p145
      %p147 = scmp.ne.s32.totalorder %s139, %s141
      %p148 = scmp.eq.s32.totalorder %s26, 1
      %p149 = por %p147, %p148
      %p150 = scmp.ne.s32.totalorder %s141, %s142
      %p151 = scmp.eq.s32.totalorder %s26, 0
      %p152 = por %p150, %p151
      %p153 = scmp.ne.s32.totalorder %s141, %s142
      %p154 = scmp.eq.s32.totalorder %s27, 1
      %p155 = por %p153, %p154
      %p157 = scmp.ne.s32.totalorder %s142, %s156
      %p158 = scmp.eq.s32.totalorder %s27, 0
      %p159 = por %p157, %p158
      %s161 = sadd.s32 %s160, 1
      %p164 = scmp.eq.s32.totalorder %s21, 1
      %p165 = scmp.ne.s32.totalorder %s160, %s162
      %p166 = scmp.eq.s32.totalorder %s21, 0
      %p167 = por %p165, %p166
      %p168 = scmp.ne.s32.totalorder %s160, %s162
      %p169 = scmp.eq.s32.totalorder %s26, 1
      %p170 = por %p168, %p169
      %p171 = scmp.ne.s32.totalorder %s162, %s163
      %p172 = scmp.eq.s32.totalorder %s26, 0
      %p173 = por %p171, %p172
      %p174 = scmp.ne.s32.totalorder %s162, %s163
      %p175 = scmp.eq.s32.totalorder %s27, 1
      %p176 = por %p174, %p175
      %p178 = scmp.ne.s32.totalorder %s163, %s177
      %p179 = scmp.eq.s32.totalorder %s27, 0
      %p180 = por %p178, %p179
      %s182 = sadd.s32 %s181, 1
      %p185 = scmp.eq.s32.totalorder %s21, 1
      %p186 = scmp.ne.s32.totalorder %s181, %s183
      %p187 = scmp.eq.s32.totalorder %s21, 0
      %p188 = por %p186, %p187
      %p189 = scmp.ne.s32.totalorder %s181, %s183
      %p190 = scmp.eq.s32.totalorder %s26, 1
      %p191 = por %p189, %p190
      %p192 = scmp.ne.s32.totalorder %s183, %s184
      %p193 = scmp.eq.s32.totalorder %s26, 0
      %p194 = por %p192, %p193
      %p195 = scmp.ne.s32.totalorder %s183, %s184
      %p196 = scmp.eq.s32.totalorder %s27, 1
      %p197 = por %p195, %p196
      %p199 = scmp.ne.s32.totalorder %s184, %s198
      %p200 = scmp.eq.s32.totalorder %s27, 0
      %p201 = por %p199, %p200
      %s203 = sadd.s32 %s202, 1
      %p206 = scmp.eq.s32.totalorder %s21, 1
      %p207 = scmp.ne.s32.totalorder %s202, %s204
      %p208 = scmp.eq.s32.totalorder %s21, 0
      %p209 = por %p207, %p208
      %p210 = scmp.ne.s32.totalorder %s202, %s204
      %p211 = scmp.eq.s32.totalorder %s26, 1
      %p212 = por %p210, %p211
      %p213 = scmp.ne.s32.totalorder %s204, %s205
      %p214 = scmp.eq.s32.totalorder %s26, 0
      %p215 = por %p213, %p214
      %p216 = scmp.ne.s32.totalorder %s204, %s205
      %p217 = scmp.eq.s32.totalorder %s27, 1
      %p218 = por %p216, %p217
      %p220 = scmp.ne.s32.totalorder %s205, %s219
      %p221 = scmp.eq.s32.totalorder %s27, 0
      %p222 = por %p220, %p221
      %s224 = sadd.s32 %s223, 1
      %p227 = scmp.eq.s32.totalorder %s21, 1
      %p228 = scmp.ne.s32.totalorder %s223, %s225
      %p229 = scmp.eq.s32.totalorder %s21, 0
      %p230 = por %p228, %p229
      %p231 = scmp.ne.s32.totalorder %s223, %s225
      %p232 = scmp.eq.s32.totalorder %s26, 1
      %p233 = por %p231, %p232
      %p234 = scmp.ne.s32.totalorder %s225, %s226
      %p235 = scmp.eq.s32.totalorder %s26, 0
      %p236 = por %p234, %p235
      %p237 = scmp.ne.s32.totalorder %s225, %s226
      %p238 = scmp.eq.s32.totalorder %s27, 1
      %p239 = por %p237, %p238
      %p241 = scmp.ne.s32.totalorder %s226, %s240
      %p242 = scmp.eq.s32.totalorder %s27, 0
      %p243 = por %p241, %p242
      %s244 = ssub.s32 %s21, %s28
      %p245 = scmp.eq.s32.totalorder %s244, 0
      %s247 = sadd.s32 %s246, 1
      %s248 = scalar_select %p245, %s246, %s247
      %p251 = pneg %p245
      %p252 = scmp.eq.s32.totalorder %s21, 1
      %p253 = por %p251, %p252
      %p254 = scmp.ne.s32.totalorder %s246, %s249
      %p255 = scmp.eq.s32.totalorder %s21, 0
      %p256 = por %p254, %p255
      %p257 = scmp.ne.s32.totalorder %s246, %s249
      %p258 = scmp.eq.s32.totalorder %s26, 1
      %p259 = por %p257, %p258
      %p260 = scmp.ne.s32.totalorder %s249, %s250
      %p261 = scmp.eq.s32.totalorder %s26, 0
      %p262 = por %p260, %p261
      %p263 = scmp.ne.s32.totalorder %s249, %s250
      %p264 = scmp.eq.s32.totalorder %s27, 1
      %p265 = por %p263, %p264
      %p267 = scmp.ne.s32.totalorder %s250, %s266
      %p268 = scmp.eq.s32.totalorder %s27, 0
      %p269 = por %p267, %p268
      %p270 = scmp.le.s32.totalorder 1, %s21
      %p271 = scmp.lt.s32.totalorder %s21, 3
      %p272 = pnand %p270, %p271
      %p273 = pneg %p272
      // Predicated region
      $region9: #{tpu_custom_call.1} parent=5 // pred_check
        _
      $region10: #{tpu_custom_call.1} parent=5 // pred_check_branch
        %275 = sbr.rel (%p272) target = $region12
      $region11: #{tpu_custom_call.1} parent=5 // pred_region
        %s276 = ssub.s32 %s21, 1
        // Predicated region
        $region13: #{tpu_custom_call.1} parent=11 // pred_check
          %p277 = pneg %p68
        $region14: #{tpu_custom_call.1} parent=11 // pred_check_branch
          %279 = sbr.rel (%p277) target = $region16
        $region15: #{tpu_custom_call.1} parent=11 // pred_region
          %281 = vsyncadd [#allocation3], 0
          %s283 = sshll.u32 %s1, 4
          %s284 = int_to_ptr.hbm [resolvable:$true] %s283
          %s285 = sshll.u32 [#allocation2], 4
          %s286 = int_to_ptr.vmem [resolvable:$true] %s285
          %288 = dma.hbm_to_vmem [thread:$0]  %s284, 64, %s286, [#allocation3]
        $region16: #{tpu_custom_call.1} parent=11 // pred_fallthru
          _
        // Predicated region
        $region17: #{tpu_custom_call.1} parent=11 // pred_check
          %p289 = pneg %p89
        $region18: #{tpu_custom_call.1} parent=11 // pred_check_branch
          %291 = sbr.rel (%p289) target = $region20
        $region19: #{tpu_custom_call.1} parent=11 // pred_region
          _
        $region20: #{tpu_custom_call.1} parent=11 // pred_fallthru
          _
        // Predicated region
        $region21: #{tpu_custom_call.1} parent=11 // pred_check
          %p292 = pneg %p110
        $region22: #{tpu_custom_call.1} parent=11 // pred_check_branch
          %294 = sbr.rel (%p292) target = $region24
        $region23: #{tpu_custom_call.1} parent=11 // pred_region
          _
        $region24: #{tpu_custom_call.1} parent=11 // pred_fallthru
          _
        // Predicated region
        $region25: #{tpu_custom_call.1} parent=11 // pred_check
          %p295 = pneg %p131
        $region26: #{tpu_custom_call.1} parent=11 // pred_check_branch
          %297 = sbr.rel (%p295) target = $region28
        $region27: #{tpu_custom_call.1} parent=11 // pred_region
          _
        $region28: #{tpu_custom_call.1} parent=11 // pred_fallthru
          _
        // Predicated region
        $region29: #{tpu_custom_call.1} parent=11 // pred_check
          %p298 = pneg %p152
        $region30: #{tpu_custom_call.1} parent=11 // pred_check_branch
          %300 = sbr.rel (%p298) target = $region32
        $region31: #{tpu_custom_call.1} parent=11 // pred_region
          _
        $region32: #{tpu_custom_call.1} parent=11 // pred_fallthru
          _
        // Predicated region
        $region33: #{tpu_custom_call.1} parent=11 // pred_check
          %p301 = pneg %p173
        $region34: #{tpu_custom_call.1} parent=11 // pred_check_branch
          %303 = sbr.rel (%p301) target = $region36
        $region35: #{tpu_custom_call.1} parent=11 // pred_region
          %305 = vsyncadd [#allocation6], 0
          %s306 = sshll.u32 %s6, 4
          %s307 = int_to_ptr.hbm [resolvable:$true] %s306
          %s308 = sshll.u32 [#allocation5], 4
          %s309 = int_to_ptr.vmem [resolvable:$true] %s308
          %314 = dma.hbm_to_vmem [thread:$0]  %s307, 256, %s309, [#allocation6], 64, 64, 4
        $region36: #{tpu_custom_call.1} parent=11 // pred_fallthru
          _
        // Predicated region
        $region37: #{tpu_custom_call.1} parent=11 // pred_check
          %p315 = pneg %p194
        $region38: #{tpu_custom_call.1} parent=11 // pred_check_branch
          %317 = sbr.rel (%p315) target = $region40
        $region39: #{tpu_custom_call.1} parent=11 // pred_region
          _
        $region40: #{tpu_custom_call.1} parent=11 // pred_fallthru
          _
        // Predicated region
        $region41: #{tpu_custom_call.1} parent=11 // pred_check
          %p318 = pneg %p215
        $region42: #{tpu_custom_call.1} parent=11 // pred_check_branch
          %320 = sbr.rel (%p318) target = $region44
        $region43: #{tpu_custom_call.1} parent=11 // pred_region
          _
        $region44: #{tpu_custom_call.1} parent=11 // pred_fallthru
          _
        // Predicated region
        $region45: #{tpu_custom_call.1} parent=11 // pred_check
          %p321 = pneg %p236
        $region46: #{tpu_custom_call.1} parent=11 // pred_check_branch
          %323 = sbr.rel (%p321) target = $region48
        $region47: #{tpu_custom_call.1} parent=11 // pred_region
          _
        $region48: #{tpu_custom_call.1} parent=11 // pred_fallthru
          _
      $region12: #{tpu_custom_call.1} parent=5 // pred_fallthru
        _
      %p324 = scmp.lt.s32.totalorder %s21, 2
      // Predicated region
      $region49: #{tpu_custom_call.1} parent=5 // pred_check
        %p325 = pneg %p324
      $region50: #{tpu_custom_call.1} parent=5 // pred_check_branch
        %327 = sbr.rel (%p325) target = $region52
      $region51: #{tpu_custom_call.1} parent=5 // pred_region
        // Predicated region
        $region53: #{tpu_custom_call.1} parent=51 // pred_check
          %p328 = pneg %p41
        $region54: #{tpu_custom_call.1} parent=51 // pred_check_branch
          %330 = sbr.rel (%p328) target = $region56
        $region55: #{tpu_custom_call.1} parent=51 // pred_region
          %p331 = scmp.lt.s32.totalorder %s21, 1
          %s332 = scalar_select %p331, %s21, 1
          %s333 = smul.addr %s332, 8
          %s334 = scalar_lea.vmem %s0, %s333
        $region56: #{tpu_custom_call.1} parent=51 // pred_fallthru
          _
      $region52: #{tpu_custom_call.1} parent=5 // pred_fallthru
        _
      %p335 = scmp.le.s32.totalorder 1, %s21
      %p336 = scmp.lt.s32.totalorder %s21, 3
      %p337 = pnand %p335, %p336
      %p338 = pneg %p337
      // Predicated region
      $region57: #{tpu_custom_call.1} parent=5 // pred_check
        _
      $region58: #{tpu_custom_call.1} parent=5 // pred_check_branch
        %340 = sbr.rel (%p337) target = $region60
      $region59: #{tpu_custom_call.1} parent=5 // pred_region
        %s341 = ssub.s32 %s21, 1
        // Predicated region
        $region61: #{tpu_custom_call.1} parent=59 // pred_check
          %p342 = pneg %p68
        $region62: #{tpu_custom_call.1} parent=59 // pred_check_branch
          %344 = sbr.rel (%p342) target = $region64
        $region63: #{tpu_custom_call.1} parent=59 // pred_region
          %346 = dma.done [#allocation3], 64
        $region64: #{tpu_custom_call.1} parent=59 // pred_fallthru
          _
        // Predicated region
        $region65: #{tpu_custom_call.1} parent=59 // pred_check
          %p347 = pneg %p173
        $region66: #{tpu_custom_call.1} parent=59 // pred_check_branch
          %349 = sbr.rel (%p347) target = $region68
        $region67: #{tpu_custom_call.1} parent=59 // pred_region
          %351 = dma.done [#allocation6], 256
        $region68: #{tpu_custom_call.1} parent=59 // pred_fallthru
          _
        %p352 = scmp.lt.s32.totalorder %s26, 1
        %s353 = scalar_select %p352, %s26, 1
        %s354 = smul.addr %s353, 8
        %s355 = scalar_lea.vmem %s0, %s354
        %p356 = pneg %p47
        %p357 = pneg %p44
        %p358 = pneg %p68
        %p359 = pneg %p65
        %p360 = pneg %p89
        %p361 = pneg %p86
        %p362 = pneg %p110
        %p363 = pneg %p107
        %p364 = pneg %p131
        %p365 = pneg %p128
        %p366 = pneg %p152
        %p367 = pneg %p149
        %p368 = pneg %p173
        %p369 = pneg %p170
        %p370 = pneg %p194
        %p371 = pneg %p191
        %p372 = pneg %p215
        %p373 = pneg %p212
        %p374 = pneg %p236
        %p375 = pneg %p233
        %p376 = pneg %p262
        %p377 = pneg %p259
        %s378 = sand.u32 %s249, 1
        %s379 = scalar_lea.sflag [#allocation4], %s378
        %s380 = sand.u32 %s249, 1
        %s381 = smul.addr %s380, 8
        %s382 = scalar_lea.vmem [#allocation7], %s381
        %p383 = scmp.lt.s32.totalorder %s26, 1
        %s384 = scalar_select %p383, %s26, 1
        %s385 = smul.addr %s384, 8
        %s386 = scalar_lea.vmem %s0, %s385
        %v388 = vld [vmem:[%s386] sm:$0xff]
        %v389 = vld [vmem:[#allocation2] sm:$0x1]
        %v390 = vld [vmem:[#allocation2 + $0x1] sm:$0x1]
        %vm391 = vcmask 261120
        %v392 = vsel %vm391, %v388, 0.0
        %393 = vadd.xlane.f32.xlu0 %v392
        %v394 = vpop.xlane.xlu0 %393
        %v395 = vrcp.pop 32.0
        %v396 = vmul.f32 32.0, %v395
        %v397 = vsub.f32 1.0, %v396
        %v398 = vmul.f32 %v395, %v397
        %v399 = vadd.f32 %v395, %v398
        %vm400 = vweird.f32 %v395
        %v401 = vsel %vm400, %v395, %v399
        %v402 = vmul.f32 %v394, %v401
        %v403 = vsub.f32 %v388, %v402
        %v404 = vmul.f32 %v403, %v403
        %v405 = vsel %vm391, %v404, 0.0
        %406 = vadd.xlane.f32.xlu0 %v405
        %v407 = vpop.xlane.xlu0 %406
        %v408 = vmul.f32 %v407, %v401
        %v409 = vadd.f32 %v408, 1e-05
        %v410 = vrsqrt.pop %v409
        %v411 = vmul.f32 %v410, %v409
        %v412 = vmul.f32 %v411, %v410
        %v413 = vmul.f32 0.5, %v412
        %v414 = vsub.f32 1.5, %v413
        %v415 = vmul.f32 %v410, %v414
        %vm416 = vweird.f32 %v409
        %vm417 = vweird.f32 %v410
        %vm418 = vmor %vm416, %vm417
        %v419 = vsel %vm418, %v410, %v415
        %v420 = vmul.f32 %v403, %v419
        %v421 = vperm.slane %v389, 0
        %v422 = vmul.f32 %v420, %v421
        %v423 = vperm.slane %v390, 0
        %v424 = vadd.f32 %v422, %v423
        %v425 = vpack.c.bf16 %v424, %v424
        %v426 = vld [vmem:[%s2] sm:$0xf]
        %v427 = vld [vmem:[%s2 + $0x4] sm:$0xf]
        %v428 = vld [vmem:[%s2 + $0x8] sm:$0xf]
        %v429 = vld [vmem:[%s2 + $0xc] sm:$0xf]
        %v430 = vld [vmem:[%s3] sm:$0x1]
        %v432 = vperm.slane %v430, 0
        %v438 = vunpack.c.l.b16 %v426
        %v439 = vunpack.c.l.b16 %v427
        %v440 = vunpack.c.l.b16 %v428
        %v441 = vunpack.c.l.b16 %v429
        %v442 = vpack.c.b16 %v439, %v438
        %v443 = vpack.c.b16 %v441, %v440
        %v447 = vsel %vm391, %v425, 0
        %449 = vmatpush.bf16.msra.mxu0 0
        %450 = vmatpush.bf16.msra.mxu0 0
        %451 = vmatpush.bf16.msra.mxu0 0
        %452 = vmatpush.bf16.msra.mxu0 0
        %453 = vmatpush.bf16.msra.mxu0 0
        %454 = vmatpush.bf16.msra.mxu0 0
        %455 = vmatpush.bf16.msra.mxu0 %v443
        %456 = vmatpush.bf16.msra.mxu0 %v442
        %457 = vmatmul.bf16.gmra.mxu0 %v447
        %v458 = vpop.f32.mrf.mxu0
        %v459 = vadd.f32 %v432, %v458
        %v460 = vpop.f32.mrf.mxu0
        %461 = vdwg.mxu0
        %463 = vrot.lane.b32.xlu0 %v459, 120
        %v464 = vpop.permute.xlu0 %463
        %466 = vrot.lane.b32.xlu0 %v459, 112
        %v467 = vpop.permute.xlu0 %466
        %469 = vrot.lane.b32.xlu0 %v459, 104
        %v470 = vpop.permute.xlu0 %469
        %v472 = vrot.slane %v467, 4
        %vm473 = vcmask 1047556
        %v474 = vsel %vm473, %v472, %v459
        %v475 = vrot.slane %v459, 4
        %v476 = vsel %vm473, %v467, %v475
        %v478 = vunpack.c.l.s4 1983009808
        %v479 = vunpack.c.0.s8 %v478
        %v480 = vperm.slane %v474, %v479
        %v482 = vunpack.c.l.s4 1983009808
        %v483 = vunpack.c.0.s8 %v482
        %v484 = vperm.slane %v476, %v483
        %v485 = vrot.slane %v470, 4
        %v486 = vsel %vm473, %v485, %v464
        %v487 = vrot.slane %v464, 4
        %v488 = vsel %vm473, %v470, %v487
        %v490 = vunpack.c.l.s4 1983009808
        %v491 = vunpack.c.0.s8 %v490
        %v492 = vperm.slane %v486, %v491
        %v494 = vunpack.c.l.s4 1983009808
        %v495 = vunpack.c.0.s8 %v494
        %v496 = vperm.slane %v488, %v495
        %v497 = vrot.slane %v492, 4
        %v498 = vsel %vm473, %v497, %v480
        %v499 = vrot.slane %v480, 4
        %v500 = vsel %vm473, %v492, %v499
        %v502 = vunpack.c.l.s4 1934713408
        %v503 = vunpack.c.0.s8 %v502
        %v504 = vperm.slane %v498, %v503
        %v506 = vunpack.c.l.s4 1934713408
        %v507 = vunpack.c.0.s8 %v506
        %v508 = vperm.slane %v500, %v507
        %v509 = vrot.slane %v496, 4
        %v510 = vsel %vm473, %v509, %v484
        %v511 = vrot.slane %v484, 4
        %v512 = vsel %vm473, %v496, %v511
        %v514 = vunpack.c.l.s4 1934713408
        %v515 = vunpack.c.0.s8 %v514
        %v516 = vperm.slane %v510, %v515
        %v518 = vunpack.c.l.s4 1934713408
        %v519 = vunpack.c.0.s8 %v518
        %v520 = vperm.slane %v512, %v519
        %v521 = vrot.slane %v504, 4
        %v522 = vsel %vm473, 0.0, %v521
        %v523 = vrot.slane %v508, 4
        %v524 = vsel %vm473, 0.0, %v523
        %v525 = vrot.slane %v516, 4
        %v526 = vsel %vm473, 0.0, %v525
        %v527 = vrot.slane %v520, 4
        %v528 = vsel %vm473, 0.0, %v527
        %529 = vrot.lane.b32.xlu0 %v459, 96
        %v530 = vpop.permute.xlu0 %529
        %531 = vrot.lane.b32.xlu0 %v464, 96
        %v532 = vpop.permute.xlu0 %531
        %533 = vrot.lane.b32.xlu0 %v467, 96
        %v534 = vpop.permute.xlu0 %533
        %535 = vrot.lane.b32.xlu0 %v470, 96
        %v536 = vpop.permute.xlu0 %535
        %v541 = vrot.slane %v534, 4
        %v542 = vsel %vm473, %v541, %v530
        %v543 = vrot.slane %v530, 4
        %v544 = vsel %vm473, %v534, %v543
        %v546 = vunpack.c.l.s4 1983009808
        %v547 = vunpack.c.0.s8 %v546
        %v548 = vperm.slane %v542, %v547
        %v550 = vunpack.c.l.s4 1983009808
        %v551 = vunpack.c.0.s8 %v550
        %v552 = vperm.slane %v544, %v551
        %v553 = vrot.slane %v536, 4
        %v554 = vsel %vm473, %v553, %v532
        %v555 = vrot.slane %v532, 4
        %v556 = vsel %vm473, %v536, %v555
        %v558 = vunpack.c.l.s4 1983009808
        %v559 = vunpack.c.0.s8 %v558
        %v560 = vperm.slane %v554, %v559
        %v562 = vunpack.c.l.s4 1983009808
        %v563 = vunpack.c.0.s8 %v562
        %v564 = vperm.slane %v556, %v563
        %v565 = vrot.slane %v560, 4
        %v566 = vsel %vm473, %v565, %v548
        %v567 = vrot.slane %v548, 4
        %v568 = vsel %vm473, %v560, %v567
        %v570 = vunpack.c.l.s4 1934713408
        %v571 = vunpack.c.0.s8 %v570
        %v572 = vperm.slane %v566, %v571
        %v574 = vunpack.c.l.s4 1934713408
        %v575 = vunpack.c.0.s8 %v574
        %v576 = vperm.slane %v568, %v575
        %v577 = vrot.slane %v564, 4
        %v578 = vsel %vm473, %v577, %v552
        %v579 = vrot.slane %v552, 4
        %v580 = vsel %vm473, %v564, %v579
        %v582 = vunpack.c.l.s4 1934713408
        %v583 = vunpack.c.0.s8 %v582
        %v584 = vperm.slane %v578, %v583
        %v586 = vunpack.c.l.s4 1934713408
        %v587 = vunpack.c.0.s8 %v586
        %v588 = vperm.slane %v580, %v587
        %v589 = vrot.slane %v572, 4
        %v590 = vsel %vm473, 0.0, %v589
        %v591 = vrot.slane %v576, 4
        %v592 = vsel %vm473, 0.0, %v591
        %v593 = vrot.slane %v584, 4
        %v594 = vsel %vm473, 0.0, %v593
        %v595 = vrot.slane %v588, 4
        %v596 = vsel %vm473, 0.0, %v595
        %597 = vrot.lane.b32.xlu0 %v459, 64
        %v598 = vpop.permute.xlu0 %597
        %599 = vrot.lane.b32.xlu0 %v464, 64
        %v600 = vpop.permute.xlu0 %599
        %601 = vrot.lane.b32.xlu0 %v467, 64
        %v602 = vpop.permute.xlu0 %601
        %603 = vrot.lane.b32.xlu0 %v470, 64
        %v604 = vpop.permute.xlu0 %603
        %v609 = vrot.slane %v602, 4
        %v610 = vsel %vm473, %v609, %v598
        %v611 = vrot.slane %v598, 4
        %v612 = vsel %vm473, %v602, %v611
        %v614 = vunpack.c.l.s4 1983009808
        %v615 = vunpack.c.0.s8 %v614
        %v616 = vperm.slane %v610, %v615
        %v618 = vunpack.c.l.s4 1983009808
        %v619 = vunpack.c.0.s8 %v618
        %v620 = vperm.slane %v612, %v619
        %v621 = vrot.slane %v604, 4
        %v622 = vsel %vm473, %v621, %v600
        %v623 = vrot.slane %v600, 4
        %v624 = vsel %vm473, %v604, %v623
        %v626 = vunpack.c.l.s4 1983009808
        %v627 = vunpack.c.0.s8 %v626
        %v628 = vperm.slane %v622, %v627
        %v630 = vunpack.c.l.s4 1983009808
        %v631 = vunpack.c.0.s8 %v630
        %v632 = vperm.slane %v624, %v631
        %v633 = vrot.slane %v628, 4
        %v634 = vsel %vm473, %v633, %v616
        %v635 = vrot.slane %v616, 4
        %v636 = vsel %vm473, %v628, %v635
        %v638 = vunpack.c.l.s4 1934713408
        %v639 = vunpack.c.0.s8 %v638
        %v640 = vperm.slane %v634, %v639
        %v642 = vunpack.c.l.s4 1934713408
        %v643 = vunpack.c.0.s8 %v642
        %v644 = vperm.slane %v636, %v643
        %v645 = vrot.slane %v632, 4
        %v646 = vsel %vm473, %v645, %v620
        %v647 = vrot.slane %v620, 4
        %v648 = vsel %vm473, %v632, %v647
        %v650 = vunpack.c.l.s4 1934713408
        %v651 = vunpack.c.0.s8 %v650
        %v652 = vperm.slane %v646, %v651
        %v654 = vunpack.c.l.s4 1934713408
        %v655 = vunpack.c.0.s8 %v654
        %v656 = vperm.slane %v648, %v655
        %v657 = vrot.slane %v640, 4
        %v658 = vsel %vm473, 0.0, %v657
        %v659 = vrot.slane %v644, 4
        %v660 = vsel %vm473, 0.0, %v659
        %v661 = vrot.slane %v652, 4
        %v662 = vsel %vm473, 0.0, %v661
        %v663 = vrot.slane %v656, 4
        %v664 = vsel %vm473, 0.0, %v663
        %v665 = vsel %vm473, %v523, %v504
        %v667 = vunpack.c.l.s4 1983009808
        %v668 = vunpack.c.0.s8 %v667
        %v669 = vperm.slane %v665, %v668
        %v670 = vrot.slane %v524, 4
        %v671 = vsel %vm473, %v670, %v522
        %v673 = vunpack.c.l.s4 1983009808
        %v674 = vunpack.c.0.s8 %v673
        %v675 = vperm.slane %v671, %v674
        %v676 = vsel %vm473, %v527, %v516
        %v678 = vunpack.c.l.s4 1983009808
        %v679 = vunpack.c.0.s8 %v678
        %v680 = vperm.slane %v676, %v679
        %v681 = vrot.slane %v528, 4
        %v682 = vsel %vm473, %v681, %v526
        %v684 = vunpack.c.l.s4 1983009808
        %v685 = vunpack.c.0.s8 %v684
        %v686 = vperm.slane %v682, %v685
        %v687 = vrot.slane %v675, 4
        %v688 = vsel %vm473, %v687, %v669
        %v689 = vrot.slane %v669, 4
        %v690 = vsel %vm473, %v675, %v689
        %v692 = vunpack.c.l.s4 1934713408
        %v693 = vunpack.c.0.s8 %v692
        %v694 = vperm.slane %v688, %v693
        %v696 = vunpack.c.l.s4 1934713408
        %v697 = vunpack.c.0.s8 %v696
        %v698 = vperm.slane %v690, %v697
        %v699 = vrot.slane %v686, 4
        %v700 = vsel %vm473, %v699, %v680
        %v701 = vrot.slane %v680, 4
        %v702 = vsel %vm473, %v686, %v701
        %v704 = vunpack.c.l.s4 1934713408
        %v705 = vunpack.c.0.s8 %v704
        %v706 = vperm.slane %v700, %v705
        %v708 = vunpack.c.l.s4 1934713408
        %v709 = vunpack.c.0.s8 %v708
        %v710 = vperm.slane %v702, %v709
        %v711 = vrot.slane %v706, 4
        %v712 = vsel %vm473, %v711, %v694
        %v713 = vrot.slane %v694, 4
        %v714 = vsel %vm473, %v706, %v713
        %v715 = vrot.slane %v710, 4
        %v716 = vsel %vm473, %v715, %v698
        %v717 = vrot.slane %v698, 4
        %v718 = vsel %vm473, %v710, %v717
        %v719 = vpack.c.bf16 %v712, %v712
        %v720 = vpack.c.bf16 %v714, %v714
        %v721 = vpack.c.bf16 %v716, %v716
        %v722 = vpack.c.bf16 %v718, %v718
        %v723 = vsel %vm473, %v591, %v572
        %v725 = vunpack.c.l.s4 1983009808
        %v726 = vunpack.c.0.s8 %v725
        %v727 = vperm.slane %v723, %v726
        %v728 = vrot.slane %v592, 4
        %v729 = vsel %vm473, %v728, %v590
        %v731 = vunpack.c.l.s4 1983009808
        %v732 = vunpack.c.0.s8 %v731
        %v733 = vperm.slane %v729, %v732
        %v734 = vsel %vm473, %v595, %v584
        %v736 = vunpack.c.l.s4 1983009808
        %v737 = vunpack.c.0.s8 %v736
        %v738 = vperm.slane %v734, %v737
        %v739 = vrot.slane %v596, 4
        %v740 = vsel %vm473, %v739, %v594
        %v742 = vunpack.c.l.s4 1983009808
        %v743 = vunpack.c.0.s8 %v742
        %v744 = vperm.slane %v740, %v743
        %v745 = vrot.slane %v733, 4
        %v746 = vsel %vm473, %v745, %v727
        %v747 = vrot.slane %v727, 4
        %v748 = vsel %vm473, %v733, %v747
        %v750 = vunpack.c.l.s4 1934713408
        %v751 = vunpack.c.0.s8 %v750
        %v752 = vperm.slane %v746, %v751
        %v754 = vunpack.c.l.s4 1934713408
        %v755 = vunpack.c.0.s8 %v754
        %v756 = vperm.slane %v748, %v755
        %v757 = vrot.slane %v744, 4
        %v758 = vsel %vm473, %v757, %v738
        %v759 = vrot.slane %v738, 4
        %v760 = vsel %vm473, %v744, %v759
        %v762 = vunpack.c.l.s4 1934713408
        %v763 = vunpack.c.0.s8 %v762
        %v764 = vperm.slane %v758, %v763
        %v766 = vunpack.c.l.s4 1934713408
        %v767 = vunpack.c.0.s8 %v766
        %v768 = vperm.slane %v760, %v767
        %v769 = vrot.slane %v764, 4
        %v770 = vsel %vm473, %v769, %v752
        %v771 = vrot.slane %v752, 4
        %v772 = vsel %vm473, %v764, %v771
        %v773 = vrot.slane %v768, 4
        %v774 = vsel %vm473, %v773, %v756
        %v775 = vrot.slane %v756, 4
        %v776 = vsel %vm473, %v768, %v775
        %v777 = vpack.c.bf16 %v770, %v770
        %v778 = vpack.c.bf16 %v772, %v772
        %v779 = vpack.c.bf16 %v774, %v774
        %v780 = vpack.c.bf16 %v776, %v776
        %v781 = vsel %vm473, %v659, %v640
        %v783 = vunpack.c.l.s4 1983009808
        %v784 = vunpack.c.0.s8 %v783
        %v785 = vperm.slane %v781, %v784
        %v786 = vrot.slane %v660, 4
        %v787 = vsel %vm473, %v786, %v658
        %v789 = vunpack.c.l.s4 1983009808
        %v790 = vunpack.c.0.s8 %v789
        %v791 = vperm.slane %v787, %v790
        %v792 = vsel %vm473, %v663, %v652
        %v794 = vunpack.c.l.s4 1983009808
        %v795 = vunpack.c.0.s8 %v794
        %v796 = vperm.slane %v792, %v795
        %v797 = vrot.slane %v664, 4
        %v798 = vsel %vm473, %v797, %v662
        %v800 = vunpack.c.l.s4 1983009808
        %v801 = vunpack.c.0.s8 %v800
        %v802 = vperm.slane %v798, %v801
        %v803 = vrot.slane %v791, 4
        %v804 = vsel %vm473, %v803, %v785
        %v805 = vrot.slane %v785, 4
        %v806 = vsel %vm473, %v791, %v805
        %v808 = vunpack.c.l.s4 1934713408
        %v809 = vunpack.c.0.s8 %v808
        %v810 = vperm.slane %v804, %v809
        %v812 = vunpack.c.l.s4 1934713408
        %v813 = vunpack.c.0.s8 %v812
        %v814 = vperm.slane %v806, %v813
        %v815 = vrot.slane %v802, 4
        %v816 = vsel %vm473, %v815, %v796
        %v817 = vrot.slane %v796, 4
        %v818 = vsel %vm473, %v802, %v817
        %v820 = vunpack.c.l.s4 1934713408
        %v821 = vunpack.c.0.s8 %v820
        %v822 = vperm.slane %v816, %v821
        %v824 = vunpack.c.l.s4 1934713408
        %v825 = vunpack.c.0.s8 %v824
        %v826 = vperm.slane %v818, %v825
        %v827 = vrot.slane %v822, 4
        %v828 = vsel %vm473, %v827, %v810
        %v829 = vrot.slane %v810, 4
        %v830 = vsel %vm473, %v822, %v829
        %v831 = vrot.slane %v826, 4
        %v832 = vsel %vm473, %v831, %v814
        %v833 = vrot.slane %v814, 4
        %v834 = vsel %vm473, %v826, %v833
        %v835 = vpack.c.bf16 %v828, %v828
        %v836 = vpack.c.bf16 %v830, %v830
        %v837 = vpack.c.bf16 %v832, %v832
        %v838 = vpack.c.bf16 %v834, %v834
        %vm839 = vcmask 64512
        %v841 = vsel %vm839, %v719, 0
        %v844 = vsel %vm839, %v777, 0
        %846 = vmatpush.bf16.xpose.msra.mxu0 0
        %847 = vmatpush.bf16.xpose.msra.mxu0 0
        %848 = vmatpush.bf16.xpose.msra.mxu0 0
        %849 = vmatpush.bf16.xpose.msra.mxu0 0
        %850 = vmatpush.bf16.xpose.msra.mxu0 0
        %851 = vmatpush.bf16.xpose.msra.mxu0 0
        %852 = vmatpush.bf16.xpose.msra.mxu0 0
        %853 = vmatpush.bf16.xpose.msra.mxu0 %v844
        %854 = vmatmul.bf16.gmra.mxu0 %v841
        %v855 = vpop.f32.mrf.mxu0
        %v856 = vadd.f32 0.0, %v855
        %v857 = vpop.f32.mrf.mxu0
        %858 = vdwg.mxu0
        %v860 = vsel %vm839, %v720, 0
        %v863 = vsel %vm839, %v778, 0
        %865 = vmatpush.bf16.xpose.msra.mxu0 0
        %866 = vmatpush.bf16.xpose.msra.mxu0 0
        %867 = vmatpush.bf16.xpose.msra.mxu0 0
        %868 = vmatpush.bf16.xpose.msra.mxu0 0
        %869 = vmatpush.bf16.xpose.msra.mxu0 0
        %870 = vmatpush.bf16.xpose.msra.mxu0 0
        %871 = vmatpush.bf16.xpose.msra.mxu0 0
        %872 = vmatpush.bf16.xpose.msra.mxu0 %v863
        %873 = vmatmul.bf16.gmra.mxu0 %v860
        %v874 = vpop.f32.mrf.mxu0
        %v875 = vadd.f32 0.0, %v874
        %v876 = vpop.f32.mrf.mxu0
        %877 = vdwg.mxu0
        %v879 = vsel %vm839, %v721, 0
        %v882 = vsel %vm839, %v779, 0
        %884 = vmatpush.bf16.xpose.msra.mxu0 0
        %885 = vmatpush.bf16.xpose.msra.mxu0 0
        %886 = vmatpush.bf16.xpose.msra.mxu0 0
        %887 = vmatpush.bf16.xpose.msra.mxu0 0
        %888 = vmatpush.bf16.xpose.msra.mxu0 0
        %889 = vmatpush.bf16.xpose.msra.mxu0 0
        %890 = vmatpush.bf16.xpose.msra.mxu0 0
        %891 = vmatpush.bf16.xpose.msra.mxu0 %v882
        %892 = vmatmul.bf16.gmra.mxu0 %v879
        %v893 = vpop.f32.mrf.mxu0
        %v894 = vadd.f32 0.0, %v893
        %v895 = vpop.f32.mrf.mxu0
        %896 = vdwg.mxu0
        %v898 = vsel %vm839, %v722, 0
        %v901 = vsel %vm839, %v780, 0
        %903 = vmatpush.bf16.xpose.msra.mxu0 0
        %904 = vmatpush.bf16.xpose.msra.mxu0 0
        %905 = vmatpush.bf16.xpose.msra.mxu0 0
        %906 = vmatpush.bf16.xpose.msra.mxu0 0
        %907 = vmatpush.bf16.xpose.msra.mxu0 0
        %908 = vmatpush.bf16.xpose.msra.mxu0 0
        %909 = vmatpush.bf16.xpose.msra.mxu0 0
        %910 = vmatpush.bf16.xpose.msra.mxu0 %v901
        %911 = vmatmul.bf16.gmra.mxu0 %v898
        %v912 = vpop.f32.mrf.mxu0
        %v913 = vadd.f32 0.0, %v912
        %v914 = vpop.f32.mrf.mxu0
        %915 = vdwg.mxu0
        %v916 = vmul.f32 %v856, 0.35355338
        %v917 = vmul.f32 %v875, 0.35355338
        %v918 = vmul.f32 %v894, 0.35355338
        %v919 = vmul.f32 %v913, 0.35355338
        %v920 = vsel %vm839, %v916, -inf
        %921 = vmax.xlane.f32.xlu0 %v920
        %v922 = vpop.xlane.xlu0 %921
        %v923 = vsel %vm839, %v917, -inf
        %924 = vmax.xlane.f32.xlu0 %v923
        %v925 = vpop.xlane.xlu0 %924
        %v926 = vsel %vm839, %v918, -inf
        %927 = vmax.xlane.f32.xlu0 %v926
        %v928 = vpop.xlane.xlu0 %927
        %v929 = vsel %vm839, %v919, -inf
        %930 = vmax.xlane.f32.xlu0 %v929
        %v931 = vpop.xlane.xlu0 %930
        %v932 = vsub.f32 %v916, %v922
        %v933 = vsub.f32 %v917, %v925
        %v934 = vsub.f32 %v918, %v928
        %v935 = vsub.f32 %v919, %v931
        %v936 = vmul.f32 %v932, 1.442695
        %v937 = vpow.pop %v936
        %v938 = vmul.f32 %v933, 1.442695
        %v939 = vpow.pop %v938
        %v940 = vmul.f32 %v934, 1.442695
        %v941 = vpow.pop %v940
        %v942 = vmul.f32 %v935, 1.442695
        %v943 = vpow.pop %v942
        %v944 = vsel %vm839, %v937, 0.0
        %945 = vadd.xlane.f32.xlu0 %v944
        %v946 = vpop.xlane.xlu0 %945
        %v947 = vsel %vm839, %v939, 0.0
        %948 = vadd.xlane.f32.xlu0 %v947
        %v949 = vpop.xlane.xlu0 %948
        %v950 = vsel %vm839, %v941, 0.0
        %951 = vadd.xlane.f32.xlu0 %v950
        %v952 = vpop.xlane.xlu0 %951
        %v953 = vsel %vm839, %v943, 0.0
        %954 = vadd.xlane.f32.xlu0 %v953
        %v955 = vpop.xlane.xlu0 %954
        %v956 = vrcp.pop %v946
        %v957 = vrcp.pop %v949
        %v958 = vrcp.pop %v952
        %v959 = vrcp.pop %v955
        %v960 = vmul.f32 %v937, %v956
        %v961 = vmul.f32 %v939, %v957
        %v962 = vmul.f32 %v941, %v958
        %v963 = vmul.f32 %v943, %v959
        %v964 = vpack.c.bf16 %v960, %v960
        %v965 = vpack.c.bf16 %v961, %v961
        %v966 = vpack.c.bf16 %v962, %v962
        %v967 = vpack.c.bf16 %v963, %v963
        %v969 = vsel %vm839, %v964, 0
        %vm971 = vcmask 1043456
        %v973 = vsel %vm971, %v835, 0
        %975 = vmatpush.bf16.msra.mxu0 0
        %976 = vmatpush.bf16.msra.mxu0 0
        %977 = vmatpush.bf16.msra.mxu0 0
        %978 = vmatpush.bf16.msra.mxu0 0
        %979 = vmatpush.bf16.msra.mxu0 0
        %980 = vmatpush.bf16.msra.mxu0 0
        %981 = vmatpush.bf16.msra.mxu0 0
        %982 = vmatpush.bf16.msra.mxu0 %v973
        %983 = vmatmul.bf16.gmra.mxu0 %v969
        %v984 = vpop.f32.mrf.mxu0
        %v985 = vadd.f32 0.0, %v984
        %v986 = vpop.f32.mrf.mxu0
        %987 = vdwg.mxu0
        %v989 = vsel %vm839, %v965, 0
        %v992 = vsel %vm971, %v836, 0
        %994 = vmatpush.bf16.msra.mxu0 0
        %995 = vmatpush.bf16.msra.mxu0 0
        %996 = vmatpush.bf16.msra.mxu0 0
        %997 = vmatpush.bf16.msra.mxu0 0
        %998 = vmatpush.bf16.msra.mxu0 0
        %999 = vmatpush.bf16.msra.mxu0 0
        %1000 = vmatpush.bf16.msra.mxu0 0
        %1001 = vmatpush.bf16.msra.mxu0 %v992
        %1002 = vmatmul.bf16.gmra.mxu0 %v989
        %v1003 = vpop.f32.mrf.mxu0
        %v1004 = vadd.f32 0.0, %v1003
        %v1005 = vpop.f32.mrf.mxu0
        %1006 = vdwg.mxu0
        %v1008 = vsel %vm839, %v966, 0
        %v1011 = vsel %vm971, %v837, 0
        %1013 = vmatpush.bf16.msra.mxu0 0
        %1014 = vmatpush.bf16.msra.mxu0 0
        %1015 = vmatpush.bf16.msra.mxu0 0
        %1016 = vmatpush.bf16.msra.mxu0 0
        %1017 = vmatpush.bf16.msra.mxu0 0
        %1018 = vmatpush.bf16.msra.mxu0 0
        %1019 = vmatpush.bf16.msra.mxu0 0
        %1020 = vmatpush.bf16.msra.mxu0 %v1011
        %1021 = vmatmul.bf16.gmra.mxu0 %v1008
        %v1022 = vpop.f32.mrf.mxu0
        %v1023 = vadd.f32 0.0, %v1022
        %v1024 = vpop.f32.mrf.mxu0
        %1025 = vdwg.mxu0
        %v1027 = vsel %vm839, %v967, 0
        %v1030 = vsel %vm971, %v838, 0
        %1032 = vmatpush.bf16.msra.mxu0 0
        %1033 = vmatpush.bf16.msra.mxu0 0
        %1034 = vmatpush.bf16.msra.mxu0 0
        %1035 = vmatpush.bf16.msra.mxu0 0
        %1036 = vmatpush.bf16.msra.mxu0 0
        %1037 = vmatpush.bf16.msra.mxu0 0
        %1038 = vmatpush.bf16.msra.mxu0 0
        %1039 = vmatpush.bf16.msra.mxu0 %v1030
        %1040 = vmatmul.bf16.gmra.mxu0 %v1027
        %v1041 = vpop.f32.mrf.mxu0
        %v1042 = vadd.f32 0.0, %v1041
        %v1043 = vpop.f32.mrf.mxu0
        %1044 = vdwg.mxu0
        %v1045 = vrot.slane %v1023, 4
        %v1046 = vsel %vm473, %v1045, %v985
        %v1047 = vrot.slane %v985, 4
        %v1048 = vsel %vm473, %v1023, %v1047
        %v1050 = vunpack.c.l.s4 1983009808
        %v1051 = vunpack.c.0.s8 %v1050
        %v1052 = vperm.slane %v1046, %v1051
        %v1054 = vunpack.c.l.s4 1983009808
        %v1055 = vunpack.c.0.s8 %v1054
        %v1056 = vperm.slane %v1048, %v1055
        %v1057 = vrot.slane %v1042, 4
        %v1058 = vsel %vm473, %v1057, %v1004
        %v1059 = vrot.slane %v1004, 4
        %v1060 = vsel %vm473, %v1042, %v1059
        %v1062 = vunpack.c.l.s4 1983009808
        %v1063 = vunpack.c.0.s8 %v1062
        %v1064 = vperm.slane %v1058, %v1063
        %v1066 = vunpack.c.l.s4 1983009808
        %v1067 = vunpack.c.0.s8 %v1066
        %v1068 = vperm.slane %v1060, %v1067
        %v1069 = vrot.slane %v1064, 4
        %v1070 = vsel %vm473, %v1069, %v1052
        %v1071 = vrot.slane %v1052, 4
        %v1072 = vsel %vm473, %v1064, %v1071
        %v1074 = vunpack.c.l.s4 1934713408
        %v1075 = vunpack.c.0.s8 %v1074
        %v1076 = vperm.slane %v1070, %v1075
        %v1078 = vunpack.c.l.s4 1934713408
        %v1079 = vunpack.c.0.s8 %v1078
        %v1080 = vperm.slane %v1072, %v1079
        %v1081 = vrot.slane %v1068, 4
        %v1082 = vsel %vm473, %v1081, %v1056
        %v1083 = vrot.slane %v1056, 4
        %v1084 = vsel %vm473, %v1068, %v1083
        %v1086 = vunpack.c.l.s4 1934713408
        %v1087 = vunpack.c.0.s8 %v1086
        %v1088 = vperm.slane %v1082, %v1087
        %v1090 = vunpack.c.l.s4 1934713408
        %v1091 = vunpack.c.0.s8 %v1090
        %v1092 = vperm.slane %v1084, %v1091
        %v1093 = vrot.slane %v1076, 4
        %v1094 = vsel %vm473, 0.0, %v1093
        %v1095 = vrot.slane %v1080, 4
        %v1096 = vsel %vm473, 0.0, %v1095
        %v1097 = vrot.slane %v1088, 4
        %v1098 = vsel %vm473, 0.0, %v1097
        %v1099 = vrot.slane %v1092, 4
        %v1100 = vsel %vm473, 0.0, %v1099
        %v1101 = vsel %vm473, %v1095, %v1076
        %v1103 = vunpack.c.l.s4 1983009808
        %v1104 = vunpack.c.0.s8 %v1103
        %v1105 = vperm.slane %v1101, %v1104
        %v1106 = vrot.slane %v1096, 4
        %v1107 = vsel %vm473, %v1106, %v1094
        %v1109 = vunpack.c.l.s4 1983009808
        %v1110 = vunpack.c.0.s8 %v1109
        %v1111 = vperm.slane %v1107, %v1110
        %v1112 = vsel %vm473, %v1099, %v1088
        %v1114 = vunpack.c.l.s4 1983009808
        %v1115 = vunpack.c.0.s8 %v1114
        %v1116 = vperm.slane %v1112, %v1115
        %v1117 = vrot.slane %v1100, 4
        %v1118 = vsel %vm473, %v1117, %v1098
        %v1120 = vunpack.c.l.s4 1983009808
        %v1121 = vunpack.c.0.s8 %v1120
        %v1122 = vperm.slane %v1118, %v1121
        %v1123 = vrot.slane %v1111, 4
        %v1124 = vsel %vm473, %v1123, %v1105
        %v1125 = vrot.slane %v1105, 4
        %v1126 = vsel %vm473, %v1111, %v1125
        %v1128 = vunpack.c.l.s4 1934713408
        %v1129 = vunpack.c.0.s8 %v1128
        %v1130 = vperm.slane %v1124, %v1129
        %v1132 = vunpack.c.l.s4 1934713408
        %v1133 = vunpack.c.0.s8 %v1132
        %v1134 = vperm.slane %v1126, %v1133
        %v1135 = vrot.slane %v1122, 4
        %v1136 = vsel %vm473, %v1135, %v1116
        %v1137 = vrot.slane %v1116, 4
        %v1138 = vsel %vm473, %v1122, %v1137
        %v1140 = vunpack.c.l.s4 1934713408
        %v1141 = vunpack.c.0.s8 %v1140
        %v1142 = vperm.slane %v1136, %v1141
        %v1144 = vunpack.c.l.s4 1934713408
        %v1145 = vunpack.c.0.s8 %v1144
        %v1146 = vperm.slane %v1138, %v1145
        %v1147 = vrot.slane %v1142, 4
        %v1148 = vsel %vm473, %v1147, %v1130
        %v1149 = vrot.slane %v1130, 4
        %v1150 = vsel %vm473, %v1142, %v1149
        %v1151 = vrot.slane %v1146, 4
        %v1152 = vsel %vm473, %v1151, %v1134
        %v1153 = vrot.slane %v1134, 4
        %v1154 = vsel %vm473, %v1146, %v1153
        %1156 = vrot.lane.b32.xlu0 %v1150, 8
        %v1157 = vpop.permute.xlu0 %1156
        %1160 = vrot.lane.b32.xlu0 %v1152, 16
        %v1161 = vpop.permute.xlu0 %1160
        %1164 = vrot.lane.b32.xlu0 %v1154, 24
        %v1165 = vpop.permute.xlu0 %1164
        %v1167 = vsel %vm839, %v1148, %v1157
        %vm1168 = vcmask 130048
        %v1169 = vsel %vm1168, %v1167, %v1161
        %vm1170 = vcmask 195584
        %v1171 = vsel %vm1170, %v1169, %v1165
        %v1172 = vpack.c.bf16 %v1171, %v1171
        %v1173 = vld [vmem:[%s4] sm:$0xf]
        %v1174 = vld [vmem:[%s4 + $0x4] sm:$0xf]
        %v1175 = vld [vmem:[%s4 + $0x8] sm:$0xf]
        %v1176 = vld [vmem:[%s4 + $0xc] sm:$0xf]
        %v1177 = vld [vmem:[%s5] sm:$0x1]
        %v1179 = vperm.slane %v1177, 0
        %v1185 = vunpack.c.l.b16 %v1173
        %v1186 = vunpack.c.l.b16 %v1174
        %v1187 = vunpack.c.l.b16 %v1175
        %v1188 = vunpack.c.l.b16 %v1176
        %v1189 = vpack.c.b16 %v1186, %v1185
        %v1190 = vpack.c.b16 %v1188, %v1187
        %v1194 = vsel %vm391, %v1172, 0
        %1196 = vmatpush.bf16.msra.mxu0 0
        %1197 = vmatpush.bf16.msra.mxu0 0
        %1198 = vmatpush.bf16.msra.mxu0 0
        %1199 = vmatpush.bf16.msra.mxu0 0
        %1200 = vmatpush.bf16.msra.mxu0 0
        %1201 = vmatpush.bf16.msra.mxu0 0
        %1202 = vmatpush.bf16.msra.mxu0 %v1190
        %1203 = vmatpush.bf16.msra.mxu0 %v1189
        %1204 = vmatmul.bf16.gmra.mxu0 %v1194
        %v1205 = vpop.f32.mrf.mxu0
        %v1206 = vadd.f32 %v1179, %v1205
        %v1207 = vpop.f32.mrf.mxu0
        %1208 = vdwg.mxu0
        %v1209 = vadd.f32 %v388, %v1206
        %v1210 = vld [vmem:[#allocation2 + $0x2] sm:$0x1]
        %v1211 = vld [vmem:[#allocation2 + $0x3] sm:$0x1]
        %v1212 = vsel %vm391, %v1209, 0.0
        %1213 = vadd.xlane.f32.xlu0 %v1212
        %v1214 = vpop.xlane.xlu0 %1213
        %v1215 = vmul.f32 %v1214, %v401
        %v1216 = vsub.f32 %v1209, %v1215
        %v1217 = vmul.f32 %v1216, %v1216
        %v1218 = vsel %vm391, %v1217, 0.0
        %1219 = vadd.xlane.f32.xlu0 %v1218
        %v1220 = vpop.xlane.xlu0 %1219
        %v1221 = vmul.f32 %v1220, %v401
        %v1222 = vadd.f32 %v1221, 1e-05
        %v1223 = vrsqrt.pop %v1222
        %v1224 = vmul.f32 %v1223, %v1222
        %v1225 = vmul.f32 %v1224, %v1223
        %v1226 = vmul.f32 0.5, %v1225
        %v1227 = vsub.f32 1.5, %v1226
        %v1228 = vmul.f32 %v1223, %v1227
        %vm1229 = vweird.f32 %v1222
        %vm1230 = vweird.f32 %v1223
        %vm1231 = vmor %vm1229, %vm1230
        %v1232 = vsel %vm1231, %v1223, %v1228
        %v1233 = vmul.f32 %v1216, %v1232
        %v1234 = vperm.slane %v1210, 0
        %v1235 = vmul.f32 %v1233, %v1234
        %v1236 = vperm.slane %v1211, 0
        %v1237 = vadd.f32 %v1235, %v1236
        %v1238 = vpack.c.bf16 %v1237, %v1237
        %v1239 = vld [vmem:[#allocation5] sm:$0xf]
        %v1240 = vld [vmem:[#allocation5 + $0x4] sm:$0xf]
        %v1241 = vld [vmem:[#allocation5 + $0x8] sm:$0xf]
        %v1242 = vld [vmem:[#allocation5 + $0xc] sm:$0xf]
        %v1243 = vld [vmem:[%s7] sm:$0x1]
        %v1245 = vperm.slane %v1243, 0
        %v1251 = vunpack.c.l.b16 %v1239
        %v1252 = vunpack.c.l.b16 %v1240
        %v1253 = vunpack.c.l.b16 %v1241
        %v1254 = vunpack.c.l.b16 %v1242
        %v1255 = vpack.c.b16 %v1252, %v1251
        %v1256 = vpack.c.b16 %v1254, %v1253
        %v1260 = vsel %vm391, %v1238, 0
        %1262 = vmatpush.bf16.msra.mxu0 0
        %1263 = vmatpush.bf16.msra.mxu0 0
        %1264 = vmatpush.bf16.msra.mxu0 0
        %1265 = vmatpush.bf16.msra.mxu0 0
        %1266 = vmatpush.bf16.msra.mxu0 0
        %1267 = vmatpush.bf16.msra.mxu0 0
        %1268 = vmatpush.bf16.msra.mxu0 %v1256
        %1269 = vmatpush.bf16.msra.mxu0 %v1255
        %1270 = vmatmul.bf16.gmra.mxu0 %v1260
        %v1271 = vpop.f32.mrf.mxu0
        %v1272 = vadd.f32 %v1245, %v1271
        %v1273 = vpop.f32.mrf.mxu0
        %1274 = vdwg.mxu0
        %v1275 = vmul.f32 %v1272, 0.5
        %v1276 = vmul.f32 %v1272, 0.70710677
        %v1277 = vmul.f32 %v1276, %v1276
        %v1278 = vmin.f32 16.0, %v1277
        %v1279 = vmul.f32 %v1278, 2.1237322e-06
        %v1280 = vadd.f32 %v1279, 0.00028619796
        %v1281 = vmul.f32 %v1278, %v1280
        %v1282 = vadd.f32 %v1281, 0.0036580483
        %v1283 = vmul.f32 %v1278, %v1282
        %v1284 = vadd.f32 %v1283, 0.05243302
        %v1285 = vmul.f32 %v1278, %v1284
        %v1286 = vadd.f32 %v1285, 0.18741608
        %v1287 = vmul.f32 %v1278, %v1286
        %v1288 = vadd.f32 %v1287, 1.1283791
        %v1289 = vmul.f32 %v1276, %v1288
        %v1290 = vmul.f32 %v1278, 3.8918573e-05
        %v1291 = vadd.f32 %v1290, 0.001143296
        %v1292 = vmul.f32 %v1278, %v1291
        %v1293 = vadd.f32 %v1292, 0.014752088
        %v1294 = vmul.f32 %v1278, %v1293
        %v1295 = vadd.f32 %v1294, 0.112945676
        %v1296 = vmul.f32 %v1278, %v1295
        %v1297 = vadd.f32 %v1296, 0.4994258
        %v1298 = vmul.f32 %v1278, %v1297
        %v1299 = vadd.f32 %v1298, 1.0
        %v1300 = vrcp.pop %v1299
        %v1301 = vmul.f32 %v1299, %v1300
        %v1302 = vsub.f32 1.0, %v1301
        %v1303 = vmul.f32 %v1300, %v1302
        %v1304 = vadd.f32 %v1300, %v1303
        %vm1305 = vweird.f32 %v1299
        %vm1306 = vweird.f32 %v1300
        %vm1307 = vmor %vm1305, %vm1306
        %v1308 = vsel %vm1307, %v1300, %v1304
        %v1309 = vand.u32 2147483647, %v1299
        %vm1310 = vcmp.eq.f32.partialorder %v1309, 8.507059e+37
        %v1311 = vand.u32 %v1299, 2147483648
        %v1312 = vor.u32 1.1754944e-38, %v1311
        %v1313 = vsel %vm1310, %v1312, %v1308
        %v1314 = vmul.f32 %v1289, %v1313
        %v1315 = vmin.f32 %v1314, 1.0
        %v1316 = vmax.f32 %v1315, -1.0
        %v1317 = vadd.f32 %v1316, 1.0
        %v1318 = vmul.f32 %v1275, %v1317
        %v1319 = vpack.c.bf16 %v1318, %v1318
        %v1320 = vld [vmem:[%s8] sm:$0xf]
        %v1321 = vld [vmem:[%s8 + $0x4] sm:$0xf]
        %v1322 = vld [vmem:[%s8 + $0x8] sm:$0xf]
        %v1323 = vld [vmem:[%s8 + $0xc] sm:$0xf]
        %v1324 = vld [vmem:[%s8 + $0x10] sm:$0xf]
        %v1325 = vld [vmem:[%s8 + $0x14] sm:$0xf]
        %v1326 = vld [vmem:[%s8 + $0x18] sm:$0xf]
        %v1327 = vld [vmem:[%s8 + $0x1c] sm:$0xf]
        %v1328 = vld [vmem:[%s9] sm:$0x1]
        %v1330 = vperm.slane %v1328, 0
        %v1340 = vunpack.c.l.b16 %v1320
        %v1341 = vunpack.c.l.b16 %v1321
        %v1342 = vunpack.c.l.b16 %v1322
        %v1343 = vunpack.c.l.b16 %v1323
        %v1344 = vunpack.c.l.b16 %v1324
        %v1345 = vunpack.c.l.b16 %v1325
        %v1346 = vunpack.c.l.b16 %v1326
        %v1347 = vunpack.c.l.b16 %v1327
        %v1348 = vpack.c.b16 %v1341, %v1340
        %v1349 = vpack.c.b16 %v1343, %v1342
        %v1350 = vpack.c.b16 %v1345, %v1344
        %v1351 = vpack.c.b16 %v1347, %v1346
        %vm1356 = vcmask 523264
        %v1358 = vsel %vm1356, %v1319, 0
        %1360 = vmatpush.bf16.msra.mxu0 0
        %1361 = vmatpush.bf16.msra.mxu0 0
        %1362 = vmatpush.bf16.msra.mxu0 0
        %1363 = vmatpush.bf16.msra.mxu0 0
        %1364 = vmatpush.bf16.msra.mxu0 %v1351
        %1365 = vmatpush.bf16.msra.mxu0 %v1350
        %1366 = vmatpush.bf16.msra.mxu0 %v1349
        %1367 = vmatpush.bf16.msra.mxu0 %v1348
        %1368 = vmatmul.bf16.gmra.mxu0 %v1358
        %v1369 = vpop.f32.mrf.mxu0
        %v1370 = vadd.f32 %v1330, %v1369
        %v1371 = vpop.f32.mrf.mxu0
        %1372 = vdwg.mxu0
        %v1373 = vadd.f32 %v1209, %v1370
        %1374 = vst.msk [vmem:[%s382] sm:$0xff] %vm391, %v1373
        %s1375 = sand.u32 %s249, 1
        %s1376 = scalar_lea.sflag [#allocation4], %s1375
        %s1377 = sand.u32 %s249, 1
        %s1378 = smul.addr %s1377, 8
        %s1379 = scalar_lea.vmem [#allocation7], %s1378
        // Predicated region
        $region69: #{tpu_custom_call.1} parent=59 // pred_check
          %p1380 = pneg %p259
        $region70: #{tpu_custom_call.1} parent=59 // pred_check_branch
          %1382 = sbr.rel (%p1380) target = $region72
        $region71: #{tpu_custom_call.1} parent=59 // pred_region
          %1384 = vsyncadd %s1376, 0
          %s1385 = smul.addr %s26, 8
          %s1386 = scalar_lea.hbm %s10, %s1385
          %s1388 = sshll.u32 %s1379, 4
          %s1389 = int_to_ptr.vmem [resolvable:$true] %s1388
          %s1390 = sshll.u32 %s1386, 4
          %s1391 = int_to_ptr.hbm [resolvable:$true] %s1390
          %1393 = dma.vmem_to_hbm [thread:$0]  %s1389, 128, %s1391, %s1376
        $region72: #{tpu_custom_call.1} parent=59 // pred_fallthru
          _
      $region60: #{tpu_custom_call.1} parent=5 // pred_fallthru
        _
      %p1394 = scmp.le.s32.totalorder 2, %s21
      // Predicated region
      $region73: #{tpu_custom_call.1} parent=5 // pred_check
        %p1395 = pneg %p1394
      $region74: #{tpu_custom_call.1} parent=5 // pred_check_branch
        %1397 = sbr.rel (%p1395) target = $region76
      $region75: #{tpu_custom_call.1} parent=5 // pred_region
        %s1398 = ssub.s32 %s21, 2
        // Predicated region
        $region77: #{tpu_custom_call.1} parent=75 // pred_check
          %p1399 = pneg %p265
        $region78: #{tpu_custom_call.1} parent=75 // pred_check_branch
          %1401 = sbr.rel (%p1399) target = $region80
        $region79: #{tpu_custom_call.1} parent=75 // pred_region
          %s1402 = sand.u32 %s250, 1
          %s1403 = scalar_lea.sflag [#allocation4], %s1402
          %s1404 = sand.u32 %s250, 1
          %s1405 = smul.addr %s1404, 8
          %s1406 = scalar_lea.vmem [#allocation7], %s1405
          %1408 = dma.done %s1403, 128
        $region80: #{tpu_custom_call.1} parent=75 // pred_fallthru
          _
      $region76: #{tpu_custom_call.1} parent=5 // pred_fallthru
        _
    $region6: #{tpu_custom_call.1} parent=1 // loop_footer
      %s25 = sadd.s32 1, %s21
    $region7: #{tpu_custom_call.1} parent=1 // loop_footer_branch
      %20 = sbr.rel target = $region3
    $region8: #{tpu_custom_call.1} parent=1 // loop_exit
      _
    %1409 = vsyncpa [#allocation3], 1
    %s1410 = scalar_lea.sflag [#allocation3], 1
    %1411 = vsyncpa %s1410, 1
    %1412 = vsyncpa [#allocation6], 1
    %1413 = vsyncpa [#allocation4], 1
    %s1414 = scalar_lea.sflag [#allocation4], 1
    %1415 = vsyncpa %s1414, 1

</llo_original>
